<compile_context>
chip_gen: v5e
topology: v5e:2x2
jax: 0.10.0
libtpu: 0.0.40
codegen_flags: <defaults>
</compile_context>

<pallas_src>
import jax
import jax.numpy as jnp
from jax import lax
from jax.experimental import pallas as pl
from jax.experimental.pallas import tpu as pltpu


_WEIGHT_NAMES = ('g1_w', 'g1_b', 'g2_w', 'g2_b',
                 'wa_t', 'quf_t', 'va_t',
                 'head_w', 'head_b', 'w0', 'w0_b')


# ----------------------------------------------------------------------------
# Fused batched decoder-step kernel (TB batch rows per grid step)
# ----------------------------------------------------------------------------
def _decoder_step_kernel(row_ref, ctx_ref, ua_ref, pat_ref,
                         g1w_ref, g1b_ref, g2w_ref, g2b_ref,
                         wa_t_ref, quf_t_ref, va_t_ref,
                         headw_ref, headb_ref, w0_ref, w0b_ref,
                         out_ref):
    f32 = jnp.float32
    TB = row_ref.shape[0]
    n = g1b_ref.shape[1] // 4
    m = headb_ref.shape[1]
    K = w0b_ref.shape[1]

    row = row_ref[...]                      # [TB, m+n+1]  = [emb_packed | h0 | ym]
    emb = row[:, 0:m]                       # even|odd-packed embedding rows
    h0 = row[:, m:m + n]
    ym = row[:, m + n:m + n + 1]            # [TB, 1] y_mask

    def gru(xh, h, w_ref, b_ref):
        # one fused matmul; gate order: r_x+r_h | z_x+z_h | n_x | n_h
        g = jnp.dot(xh, w_ref[...], preferred_element_type=f32) + b_ref[...]
        r = jax.nn.sigmoid(g[:, 0:n])
        z = jax.nn.sigmoid(g[:, n:2 * n])
        ng = jnp.tanh(g[:, 2 * n:3 * n] + r * g[:, 3 * n:4 * n])
        return (1.0 - z) * ng + z * h

    # ---------------- GRU 1 (LHS slab already laid out as [emb | h0]) --------
    s_hat = gru(row[:, 0:m + n], h0, g1w_ref, g1b_ref)
    s_hat = ym * s_hat + (1.0 - ym) * h0            # y_mask blend

    # ---------------- Attention (lane-dense [A, HW], loop over TB rows) ------
    ct_rows, alpha_rows = [], []
    for t in range(TB):
        ua_row = ua_ref[t]               # [A, HW]  (ua_b + uf_b pre-folded)
        pat_row = pat_ref[t]             # [9, HW]
        ctx_row = ctx_ref[t]             # [D, HW]
        s_row = s_hat[t:t + 1, :]        # [1, n]
        cov = jnp.dot(quf_t_ref[...], pat_row, preferred_element_type=f32)   # [A, HW]
        wa_col = lax.dot_general(wa_t_ref[...], s_row, (((1,), (1,)), ((), ())),
                                 preferred_element_type=f32)                 # [A, 1]
        e = jnp.tanh(ua_row + cov + wa_col)                                  # [A, HW]
        logits = jnp.dot(va_t_ref[...], e, preferred_element_type=f32)       # [1, HW]
        # softmax along lanes; the scalar fc_va bias is softmax-invariant
        mx = jnp.max(logits, axis=1, keepdims=True)
        p = jnp.exp(logits - mx)
        alpha = p / jnp.sum(p, axis=1, keepdims=True)                        # [1, HW]
        ct_rows.append(lax.dot_general(alpha, ctx_row, (((1,), (1,)), ((), ())),
                                       preferred_element_type=f32))          # [1, D]
        alpha_rows.append(alpha)
    ct = jnp.concatenate(ct_rows, axis=0)              # [TB, D]
    alpha_all = jnp.concatenate(alpha_rows, axis=0)    # [TB, HW]

    # ---------------- GRU 2 --------------------------------------------------
    s_new = gru(jnp.concatenate([ct, s_hat], axis=1), s_hat, g2w_ref, g2b_ref)
    s_new = ym * s_new + (1.0 - ym) * s_hat            # y_mask blend

    # ---------------- Output head (single even|odd-packed matmul + maxout) ---
    # TODO(synk): dropout on the maxout logits is identity at inference.
    xh = jnp.concatenate([ct, s_new], axis=1)                                # [TB, D+n]
    he = (jnp.dot(xh, headw_ref[...], preferred_element_type=f32)
          + headb_ref[...] + emb)                                            # [TB, m]
    maxout = jnp.maximum(he[:, 0:m // 2], he[:, m // 2:m])
    out = jnp.dot(maxout, w0_ref[...], preferred_element_type=f32) + w0b_ref[...]

    # single lane-dense output slab: [out | s | alpha]
    out_ref[:, 0:K] = out
    out_ref[:, K:K + n] = s_new
    out_ref[:, K + n:] = alpha_all


# ----------------------------------------------------------------------------
# One-time weight preparation (transposes / packing / algebraic folds)
# ----------------------------------------------------------------------------
def prepare_params(w):
    m = w['emb'].shape[1]
    n = w['gru1']['whr'].shape[0]
    D = w['wct_w'].shape[0]
    A = w['ua_w'].shape[1]
    # even|odd column permutation used for embedding + output head
    perm = jnp.concatenate([jnp.arange(0, m, 2), jnp.arange(1, m, 2)])

    def gru_pack(g, in_dim, x_perm=None):
        wir, wiz, win = g['wir'], g['wiz'], g['win']
        if x_perm is not None:                       # match permuted embedding
            wir, wiz, win = wir[x_perm], wiz[x_perm], win[x_perm]
        zx = jnp.zeros((in_dim, n), jnp.float32)
        zh = jnp.zeros((n, n), jnp.float32)
        x_block = jnp.concatenate([wir, wiz, win, zx], axis=1)               # [in, 4n]
        h_block = jnp.concatenate([g['whr'], g['whz'], zh, g['whn']], axis=1)  # [n, 4n]
        w_full = jnp.concatenate([x_block, h_block], axis=0)                 # [in+n, 4n]
        b_full = jnp.concatenate([g['bir'] + g['bhr'], g['biz'] + g['bhz'],
                                  g['bin'], g['bhn']], axis=1)               # [1, 4n]
        return w_full, b_full

    g1_w, g1_b = gru_pack(w['gru1'], m, x_perm=perm)
    g2_w, g2_b = gru_pack(w['gru2'], D)

    quf = w['qw'] @ w['uf_w']                        # [9, A]  conv_Q folded into fc_Uf
    head_full = jnp.concatenate([w['wct_w'], w['wht_w']], axis=0)            # [D+n, m]
    head_w = head_full[:, perm]                      # even cols | odd cols
    head_b = (w['wct_b'] + w['wht_b'])[:, perm]      # [1, m]

    return dict(
        emb_packed=w['emb'][:, perm],                # embedding table, packed cols
        ua_w=w['ua_w'],                              # used only in precompute
        attn_b=(w['ua_b'] + w['uf_b']).reshape(A, 1),
        g1_w=g1_w, g1_b=g1_b, g2_w=g2_w, g2_b=g2_b,
        wa_t=w['wa_w'].T,                            # [A, n]
        quf_t=quf.T,                                 # [A, 9]
        va_t=w['va_w'].T,                            # [1, A]
        head_w=head_w, head_b=head_b,
        w0=w['w0_w'], w0_b=w['w0_b'],
    )


def precompute_attention(pp, context):
    """Step-invariant Ua.ctx + (ua_b + uf_b), shape [B, A, HW].

    In a decode loop with fixed `context`, call this once and pass the result
    to decoder_forward(..., ua_ctx=...)."""
    B, D, H, W = context.shape
    ctx = context.reshape(B, D, H * W)
    return jnp.einsum('da,bdh->bah', pp['ua_w'], ctx) + pp['attn_b'][None, :, :]


# ----------------------------------------------------------------------------
# Full decoder forward (glue + single fused kernel)
# ----------------------------------------------------------------------------
def decoder_forward(pp, y, y_mask, context, pre_hidden, alpha_past,
                    ua_ctx=None, use_dropout=False):
    del use_dropout  # identity at inference
    B, D, H, W = context.shape
    HW = H * W
    n = pre_hidden.shape[1]
    m = pp['head_b'].shape[1]
    K = pp['w0_b'].shape[1]
    A = pp['wa_t'].shape[0]

    if y_mask is None:
        y_mask = jnp.ones((B,), jnp.float32)
    if ua_ctx is None:
        ua_ctx = precompute_attention(pp, context)            # [B, A, HW]

    TB = min(B, 8)                     # batch rows per grid step (f32 sublanes)
    G = pl.cdiv(B, TB)
    Bp = G * TB

    emb_packed = pp['emb_packed'][y]                           # [B, m] gather (glue)
    row = jnp.concatenate(
        [emb_packed.astype(jnp.float32),
         pre_hidden.astype(jnp.float32),
         y_mask.astype(jnp.float32)[:, None]], axis=1)         # [B, m+n+1]
    ctx = context.reshape(B, D, HW).astype(jnp.float32)        # NCHW flatten

    # im2col of alpha_past for the 3x3 coverage conv (padding=1) -> [B, 9, HW]
    ap_pad = jnp.pad(alpha_past, ((0, 0), (1, 1), (1, 1)))
    pat = jnp.stack(
        [ap_pad[:, di:di + H, dj:dj + W] for di in range(3) for dj in range(3)],
        axis=1).reshape(B, 9, HW).astype(jnp.float32)

    if Bp != B:
        padn = Bp - B
        row = jnp.pad(row, ((0, padn), (0, 0)))
        ctx = jnp.pad(ctx, ((0, padn), (0, 0), (0, 0)))
        ua_ctx = jnp.pad(ua_ctx, ((0, padn), (0, 0), (0, 0)))
        pat = jnp.pad(pat, ((0, padn), (0, 0), (0, 0)))

    OUT_W = K + n + HW
    data_specs = [
        pl.BlockSpec((TB, m + n + 1), lambda g: (g, 0)),
        pl.BlockSpec((TB, D, HW), lambda g: (g, 0, 0)),
        pl.BlockSpec((TB, A, HW), lambda g: (g, 0, 0)),
        pl.BlockSpec((TB, 9, HW), lambda g: (g, 0, 0)),
    ]
    weight_specs = [pl.BlockSpec(pp[k].shape, lambda g: (0, 0))
                    for k in _WEIGHT_NAMES]

    out_slab = pl.pallas_call(
        _decoder_step_kernel,
        grid=(G,),
        in_specs=data_specs + weight_specs,
        out_specs=pl.BlockSpec((TB, OUT_W), lambda g: (g, 0)),
        out_shape=jax.ShapeDtypeStruct((Bp, OUT_W), jnp.float32),
        compiler_params=pltpu.CompilerParams(
            dimension_semantics=("parallel",)),
    )(row, ctx, ua_ctx, pat, *[pp[k] for k in _WEIGHT_NAMES])

    out = out_slab[:B, 0:K]
    s = out_slab[:B, K:K + n]
    alpha = out_slab[:B, K + n:].reshape(B, H, W)
    return out, s, alpha


# ----------------------------------------------------------------------------
# Deterministic parameter init (synthetic; layouts are the transposed
# "x @ W" forms of the PyTorch parameters)
# ----------------------------------------------------------------------------
def init_weights(key, K, m, n, D, A, M):
    ks = iter(jax.random.split(key, 40))

    def g(*shape):
        return 0.1 * jax.random.normal(next(ks), shape, jnp.float32)

    def gru_w(in_dim):
        return dict(
            wir=g(in_dim, n), wiz=g(in_dim, n), win=g(in_dim, n),
            whr=g(n, n), whz=g(n, n), whn=g(n, n),
            bir=g(1, n), biz=g(1, n), bin=g(1, n),
            bhr=g(1, n), bhz=g(1, n), bhn=g(1, n))

    return dict(
        emb=g(K + 1, m),
        gru1=gru_w(m),
        gru2=gru_w(D),
        wa_w=g(n, A),                       # fc_Wa (no bias)
        ua_w=g(D, A), ua_b=g(1, A),         # conv_Ua 1x1
        qw=g(9, M),                         # conv_Q 3x3, flattened [kh*kw, M]
        uf_w=g(M, A), uf_b=g(1, A),         # fc_Uf
        va_w=g(A, 1), va_b=g(1, 1),         # fc_va
        wct_w=g(D, m), wct_b=g(1, m),       # fc_Wct
        wht_w=g(n, m), wht_b=g(1, m),       # fc_Wht
        w0_w=g(m // 2, K), w0_b=g(1, K),    # fc_W0
    )


# ----------------------------------------------------------------------------
# Pure-JAX reference (mirrors the PyTorch forward) for a sanity check
# ----------------------------------------------------------------------------
def _gru_ref(x, h, w):
    gir = x @ w['wir'] + w['bir']
    giz = x @ w['wiz'] + w['biz']
    gin = x @ w['win'] + w['bin']
    ghr = h @ w['whr'] + w['bhr']
    ghz = h @ w['whz'] + w['bhz']
    ghn = h @ w['whn'] + w['bhn']
    r = jax.nn.sigmoid(gir + ghr)
    z = jax.nn.sigmoid(giz + ghz)
    ng = jnp.tanh(gin + r * ghn)
    return (1.0 - z) * ng + z * h


def reference_forward(w, y, y_mask, context, pre_hidden, alpha_past):
    B, D, H, W = context.shape
    M = w['qw'].shape[1]
    embedded = w['emb'][y]
    s_hat = _gru_ref(embedded, pre_hidden, w['gru1'])
    if y_mask is not None:
        s_hat = y_mask[:, None] * s_hat + (1.0 - y_mask)[:, None] * pre_hidden
    wa_h1 = s_hat @ w['wa_w']
    ua_ctx = jnp.einsum('bdhw,da->bhwa', context, w['ua_w']) + w['ua_b'][0]
    qw4 = w['qw'].T.reshape(M, 1, 3, 3)
    cover = lax.conv_general_dilated(
        alpha_past[:, None, :, :], qw4, (1, 1), 'SAME',
        dimension_numbers=('NCHW', 'OIHW', 'NCHW'))
    cover = jnp.transpose(cover, (0, 2, 3, 1))
    cov_vec = cover @ w['uf_w'] + w['uf_b'][0]
    e = jnp.tanh(ua_ctx + wa_h1[:, None, None, :] + cov_vec)
    alpha = (e @ w['va_w'])[..., 0] + w['va_b'][0, 0]
    alpha = jax.nn.softmax(alpha.reshape(B, -1), axis=1)
    ct = (context.reshape(B, D, -1) * alpha[:, None, :]).sum(2)
    s = _gru_ref(ct, s_hat, w['gru2'])
    if y_mask is not None:
        s = y_mask[:, None] * s + (1.0 - y_mask)[:, None] * s_hat
    logit = ct @ w['wct_w'] + w['wct_b'] + s @ w['wht_w'] + w['wht_b'] + embedded
    logit = logit.reshape(B, -1, 2).max(2)
    out = logit @ w['w0_w'] + w['w0_b']
    return out, s, alpha.reshape(B, H, W)


if __name__ == "__main__":
    # params: K=8, m=32, n=32, D=8, dim_attention=32, M=16; spatial 16x16, batch 2
    B, K, m, n, D, A, M, H, W = 2, 8, 32, 32, 8, 32, 16, 16, 16

    key = jax.random.PRNGKey(0)
    kw, kd = jax.random.split(key)
    weights = init_weights(kw, K, m, n, D, A, M)
    prepared = prepare_params(weights)   # one-time weight prep (not per-step)

    k1, k2, k3, k4 = jax.random.split(kd, 4)
    y = jax.random.randint(k1, (B,), 0, K + 1)
    y_mask = jnp.array([1.0, 0.0], jnp.float32)
    context = jax.random.normal(k2, (B, D, H, W), jnp.float32)
    pre_hidden = jax.random.normal(k3, (B, n), jnp.float32)
    alpha_past = jax.random.uniform(k4, (B, H, W), jnp.float32)

    # decode-loop-invariant attention projection (hoisted out of the step kernel)
    ua_ctx = precompute_attention(prepared, context)

    out, s, alpha = decoder_forward(prepared, y, y_mask, context,
                                    pre_hidden, alpha_past, ua_ctx=ua_ctx)
    jax.block_until_ready((out, s, alpha))

    out_r, s_r, alpha_r = reference_forward(weights, y, y_mask, context,
                                            pre_hidden, alpha_past)
    assert out.shape == (B, K) and s.shape == (B, n) and alpha.shape == (B, H, W)
    assert jnp.allclose(out, out_r, atol=1e-3, rtol=1e-3)
    assert jnp.allclose(s, s_r, atol=1e-3, rtol=1e-3)
    assert jnp.allclose(alpha, alpha_r, atol=1e-3, rtol=1e-3)

    print("KERNEL_OK")
</pallas_src>

<mosaic_0001>
module attributes {stable_mosaic.version = 11 : i64} {
  func.func @_decoder_step_kernel(%arg0: i32, %arg1: memref<2x65xf32, #tpu.memory_space<vmem>>, %arg2: memref<2x8x256xf32, #tpu.memory_space<vmem>>, %arg3: memref<2x32x256xf32, #tpu.memory_space<vmem>>, %arg4: memref<2x9x256xf32, #tpu.memory_space<vmem>>, %arg5: memref<64x128xf32, #tpu.memory_space<vmem>>, %arg6: memref<1x128xf32, #tpu.memory_space<vmem>>, %arg7: memref<40x128xf32, #tpu.memory_space<vmem>>, %arg8: memref<1x128xf32, #tpu.memory_space<vmem>>, %arg9: memref<32x32xf32, #tpu.memory_space<vmem>>, %arg10: memref<32x9xf32, #tpu.memory_space<vmem>>, %arg11: memref<1x32xf32, #tpu.memory_space<vmem>>, %arg12: memref<40x32xf32, #tpu.memory_space<vmem>>, %arg13: memref<1x32xf32, #tpu.memory_space<vmem>>, %arg14: memref<16x8xf32, #tpu.memory_space<vmem>>, %arg15: memref<1x8xf32, #tpu.memory_space<vmem>>, %arg16: memref<2x296xf32, #tpu.memory_space<vmem>>) attributes {dimension_semantics = [#tpu.dimension_semantics<parallel>], iteration_bounds = array<i64: 1>, scalar_prefetch = 0 : i64, scratch_operands = 0 : i64, tpu.core_type = #tpu.core_type<tc>, window_params = [{transform_indices = @transform_0, window_bounds = array<i64: 2, 65>}, {transform_indices = @transform_1, window_bounds = array<i64: 2, 8, 256>}, {transform_indices = @transform_2, window_bounds = array<i64: 2, 32, 256>}, {transform_indices = @transform_3, window_bounds = array<i64: 2, 9, 256>}, {pipeline_mode = #tpu.pipeline_mode<synchronous>, transform_indices = @transform_4, window_bounds = array<i64: 64, 128>}, {pipeline_mode = #tpu.pipeline_mode<synchronous>, transform_indices = @transform_5, window_bounds = array<i64: 1, 128>}, {pipeline_mode = #tpu.pipeline_mode<synchronous>, transform_indices = @transform_6, window_bounds = array<i64: 40, 128>}, {pipeline_mode = #tpu.pipeline_mode<synchronous>, transform_indices = @transform_7, window_bounds = array<i64: 1, 128>}, {pipeline_mode = #tpu.pipeline_mode<synchronous>, transform_indices = @transform_8, window_bounds = array<i64: 32, 32>}, {pipeline_mode = #tpu.pipeline_mode<synchronous>, transform_indices = @transform_9, window_bounds = array<i64: 32, 9>}, {pipeline_mode = #tpu.pipeline_mode<synchronous>, transform_indices = @transform_10, window_bounds = array<i64: 1, 32>}, {pipeline_mode = #tpu.pipeline_mode<synchronous>, transform_indices = @transform_11, window_bounds = array<i64: 40, 32>}, {pipeline_mode = #tpu.pipeline_mode<synchronous>, transform_indices = @transform_12, window_bounds = array<i64: 1, 32>}, {pipeline_mode = #tpu.pipeline_mode<synchronous>, transform_indices = @transform_13, window_bounds = array<i64: 16, 8>}, {pipeline_mode = #tpu.pipeline_mode<synchronous>, transform_indices = @transform_14, window_bounds = array<i64: 1, 8>}, {transform_indices = @transform_15, window_bounds = array<i64: 2, 296>}]} {
    %c0 = arith.constant 0 : index
    %c0_0 = arith.constant 0 : index
    %0 = vector.load %arg1[%c0, %c0_0] : memref<2x65xf32, #tpu.memory_space<vmem>>, vector<2x65xf32>
    %1 = vector.extract_strided_slice %0 {offsets = [0, 0], sizes = [2, 32], strides = [1, 1]} : vector<2x65xf32> to vector<2x32xf32>
    %2 = vector.extract_strided_slice %0 {offsets = [0, 32], sizes = [2, 32], strides = [1, 1]} : vector<2x65xf32> to vector<2x32xf32>
    %3 = vector.extract_strided_slice %0 {offsets = [0, 64], sizes = [2, 1], strides = [1, 1]} : vector<2x65xf32> to vector<2x1xf32>
    %4 = vector.extract_strided_slice %0 {offsets = [0, 0], sizes = [2, 64], strides = [1, 1]} : vector<2x65xf32> to vector<2x64xf32>
    %c0_1 = arith.constant 0 : index
    %c0_2 = arith.constant 0 : index
    %5 = vector.load %arg5[%c0_1, %c0_2] : memref<64x128xf32, #tpu.memory_space<vmem>>, vector<64x128xf32>
    %cst = arith.constant dense<0.000000e+00> : vector<2x128xf32>
    %6 = tpu.matmul %4, %5, %cst {dimension_numbers = #tpu.dot_dimension_numbers<[1], [0], [0], [1], [0, 0, 1, 1], [], []>} : vector<2x64xf32>, vector<64x128xf32>, vector<2x128xf32> -> vector<2x128xf32>
    %c0_3 = arith.constant 0 : index
    %c0_4 = arith.constant 0 : index
    %7 = vector.load %arg6[%c0_3, %c0_4] : memref<1x128xf32, #tpu.memory_space<vmem>>, vector<1x128xf32>
    %8 = vector.broadcast %7 : vector<1x128xf32> to vector<2x128xf32>
    %9 = arith.addf %6, %8 : vector<2x128xf32>
    %10 = vector.extract_strided_slice %9 {offsets = [0, 0], sizes = [2, 32], strides = [1, 1]} : vector<2x128xf32> to vector<2x32xf32>
    %11 = arith.negf %10 : vector<2x32xf32>
    %12 = math.exp %11 : vector<2x32xf32>
    %cst_5 = arith.constant 1.000000e+00 : f32
    %13 = vector.broadcast %cst_5 : f32 to vector<2x32xf32>
    %14 = arith.addf %13, %12 : vector<2x32xf32>
    %15 = arith.divf %13, %14 : vector<2x32xf32>
    %16 = vector.extract_strided_slice %9 {offsets = [0, 32], sizes = [2, 32], strides = [1, 1]} : vector<2x128xf32> to vector<2x32xf32>
    %17 = arith.negf %16 : vector<2x32xf32>
    %18 = math.exp %17 : vector<2x32xf32>
    %cst_6 = arith.constant 1.000000e+00 : f32
    %19 = vector.broadcast %cst_6 : f32 to vector<2x32xf32>
    %20 = arith.addf %19, %18 : vector<2x32xf32>
    %21 = arith.divf %19, %20 : vector<2x32xf32>
    %22 = vector.extract_strided_slice %9 {offsets = [0, 64], sizes = [2, 32], strides = [1, 1]} : vector<2x128xf32> to vector<2x32xf32>
    %23 = vector.extract_strided_slice %9 {offsets = [0, 96], sizes = [2, 32], strides = [1, 1]} : vector<2x128xf32> to vector<2x32xf32>
    %24 = arith.mulf %15, %23 : vector<2x32xf32>
    %25 = arith.addf %22, %24 : vector<2x32xf32>
    %26 = math.tanh %25 : vector<2x32xf32>
    %cst_7 = arith.constant 1.000000e+00 : f32
    %27 = vector.broadcast %cst_7 : f32 to vector<2x32xf32>
    %28 = arith.subf %27, %21 : vector<2x32xf32>
    %29 = arith.mulf %28, %26 : vector<2x32xf32>
    %30 = arith.mulf %21, %2 : vector<2x32xf32>
    %31 = arith.addf %29, %30 : vector<2x32xf32>
    %32 = vector.broadcast %3 : vector<2x1xf32> to vector<2x32xf32>
    %33 = arith.mulf %32, %31 : vector<2x32xf32>
    %cst_8 = arith.constant 1.000000e+00 : f32
    %34 = vector.broadcast %cst_8 : f32 to vector<2x1xf32>
    %35 = arith.subf %34, %3 : vector<2x1xf32>
    %36 = vector.broadcast %35 : vector<2x1xf32> to vector<2x32xf32>
    %37 = arith.mulf %36, %2 : vector<2x32xf32>
    %38 = arith.addf %33, %37 : vector<2x32xf32>
    %c0_9 = arith.constant 0 : index
    %c0_10 = arith.constant 0 : index
    %c0_11 = arith.constant 0 : index
    %39 = vector.load %arg3[%c0_9, %c0_10, %c0_11] : memref<2x32x256xf32, #tpu.memory_space<vmem>>, vector<1x32x256xf32>
    %40 = vector.shape_cast %39 : vector<1x32x256xf32> to vector<32x256xf32>
    %c0_12 = arith.constant 0 : index
    %c0_13 = arith.constant 0 : index
    %c0_14 = arith.constant 0 : index
    %41 = vector.load %arg4[%c0_12, %c0_13, %c0_14] : memref<2x9x256xf32, #tpu.memory_space<vmem>>, vector<1x9x256xf32>
    %42 = vector.shape_cast %41 : vector<1x9x256xf32> to vector<9x256xf32>
    %c0_15 = arith.constant 0 : index
    %c0_16 = arith.constant 0 : index
    %c0_17 = arith.constant 0 : index
    %43 = vector.load %arg2[%c0_15, %c0_16, %c0_17] : memref<2x8x256xf32, #tpu.memory_space<vmem>>, vector<1x8x256xf32>
    %44 = vector.shape_cast %43 : vector<1x8x256xf32> to vector<8x256xf32>
    %45 = vector.extract_strided_slice %38 {offsets = [0, 0], sizes = [1, 32], strides = [1, 1]} : vector<2x32xf32> to vector<1x32xf32>
    %c0_18 = arith.constant 0 : index
    %c0_19 = arith.constant 0 : index
    %46 = vector.load %arg10[%c0_18, %c0_19] : memref<32x9xf32, #tpu.memory_space<vmem>>, vector<32x9xf32>
    %cst_20 = arith.constant dense<0.000000e+00> : vector<32x256xf32>
    %47 = tpu.matmul %46, %42, %cst_20 {dimension_numbers = #tpu.dot_dimension_numbers<[1], [0], [0], [1], [0, 0, 1, 1], [], []>} : vector<32x9xf32>, vector<9x256xf32>, vector<32x256xf32> -> vector<32x256xf32>
    %c0_21 = arith.constant 0 : index
    %c0_22 = arith.constant 0 : index
    %48 = vector.load %arg9[%c0_21, %c0_22] : memref<32x32xf32, #tpu.memory_space<vmem>>, vector<32x32xf32>
    %cst_23 = arith.constant dense<0.000000e+00> : vector<32x1xf32>
    %49 = tpu.matmul %48, %45, %cst_23 {dimension_numbers = #tpu.dot_dimension_numbers<[1], [1], [0], [0], [0, 0, 1, 0], [], []>} : vector<32x32xf32>, vector<1x32xf32>, vector<32x1xf32> -> vector<32x1xf32>
    %50 = arith.addf %40, %47 : vector<32x256xf32>
    %51 = vector.broadcast %49 : vector<32x1xf32> to vector<32x256xf32>
    %52 = arith.addf %50, %51 : vector<32x256xf32>
    %53 = math.tanh %52 : vector<32x256xf32>
    %c0_24 = arith.constant 0 : index
    %c0_25 = arith.constant 0 : index
    %54 = vector.load %arg11[%c0_24, %c0_25] : memref<1x32xf32, #tpu.memory_space<vmem>>, vector<1x32xf32>
    %cst_26 = arith.constant dense<0.000000e+00> : vector<1x256xf32>
    %55 = tpu.matmul %54, %53, %cst_26 {dimension_numbers = #tpu.dot_dimension_numbers<[1], [0], [0], [1], [0, 0, 1, 1], [], []>} : vector<1x32xf32>, vector<32x256xf32>, vector<1x256xf32> -> vector<1x256xf32>
    %cst_27 = arith.constant dense<0xFF800000> : vector<1xf32>
    %56 = vector.multi_reduction <maximumf>, %55, %cst_27 [1] : vector<1x256xf32> to vector<1xf32>
    %57 = vector.shape_cast %56 : vector<1xf32> to vector<1x1xf32>
    %58 = vector.broadcast %57 : vector<1x1xf32> to vector<1x256xf32>
    %59 = arith.subf %55, %58 : vector<1x256xf32>
    %60 = math.exp %59 : vector<1x256xf32>
    %cst_28 = arith.constant dense<0.000000e+00> : vector<1xf32>
    %61 = vector.multi_reduction <add>, %60, %cst_28 [1] : vector<1x256xf32> to vector<1xf32>
    %62 = vector.shape_cast %61 : vector<1xf32> to vector<1x1xf32>
    %63 = vector.broadcast %62 : vector<1x1xf32> to vector<1x256xf32>
    %64 = arith.divf %60, %63 : vector<1x256xf32>
    %cst_29 = arith.constant dense<0.000000e+00> : vector<1x8xf32>
    %65 = tpu.matmul %64, %44, %cst_29 {dimension_numbers = #tpu.dot_dimension_numbers<[1], [1], [0], [0], [0, 0, 1, 0], [], []>} : vector<1x256xf32>, vector<8x256xf32>, vector<1x8xf32> -> vector<1x8xf32>
    %c1 = arith.constant 1 : index
    %c0_30 = arith.constant 0 : index
    %c0_31 = arith.constant 0 : index
    %66 = vector.load %arg3[%c1, %c0_30, %c0_31] : memref<2x32x256xf32, #tpu.memory_space<vmem>>, vector<1x32x256xf32>
    %67 = vector.shape_cast %66 : vector<1x32x256xf32> to vector<32x256xf32>
    %c1_32 = arith.constant 1 : index
    %c0_33 = arith.constant 0 : index
    %c0_34 = arith.constant 0 : index
    %68 = vector.load %arg4[%c1_32, %c0_33, %c0_34] : memref<2x9x256xf32, #tpu.memory_space<vmem>>, vector<1x9x256xf32>
    %69 = vector.shape_cast %68 : vector<1x9x256xf32> to vector<9x256xf32>
    %c1_35 = arith.constant 1 : index
    %c0_36 = arith.constant 0 : index
    %c0_37 = arith.constant 0 : index
    %70 = vector.load %arg2[%c1_35, %c0_36, %c0_37] : memref<2x8x256xf32, #tpu.memory_space<vmem>>, vector<1x8x256xf32>
    %71 = vector.shape_cast %70 : vector<1x8x256xf32> to vector<8x256xf32>
    %72 = vector.extract_strided_slice %38 {offsets = [1, 0], sizes = [1, 32], strides = [1, 1]} : vector<2x32xf32> to vector<1x32xf32>
    %c0_38 = arith.constant 0 : index
    %c0_39 = arith.constant 0 : index
    %73 = vector.load %arg10[%c0_38, %c0_39] : memref<32x9xf32, #tpu.memory_space<vmem>>, vector<32x9xf32>
    %cst_40 = arith.constant dense<0.000000e+00> : vector<32x256xf32>
    %74 = tpu.matmul %73, %69, %cst_40 {dimension_numbers = #tpu.dot_dimension_numbers<[1], [0], [0], [1], [0, 0, 1, 1], [], []>} : vector<32x9xf32>, vector<9x256xf32>, vector<32x256xf32> -> vector<32x256xf32>
    %c0_41 = arith.constant 0 : index
    %c0_42 = arith.constant 0 : index
    %75 = vector.load %arg9[%c0_41, %c0_42] : memref<32x32xf32, #tpu.memory_space<vmem>>, vector<32x32xf32>
    %cst_43 = arith.constant dense<0.000000e+00> : vector<32x1xf32>
    %76 = tpu.matmul %75, %72, %cst_43 {dimension_numbers = #tpu.dot_dimension_numbers<[1], [1], [0], [0], [0, 0, 1, 0], [], []>} : vector<32x32xf32>, vector<1x32xf32>, vector<32x1xf32> -> vector<32x1xf32>
    %77 = arith.addf %67, %74 : vector<32x256xf32>
    %78 = vector.broadcast %76 : vector<32x1xf32> to vector<32x256xf32>
    %79 = arith.addf %77, %78 : vector<32x256xf32>
    %80 = math.tanh %79 : vector<32x256xf32>
    %c0_44 = arith.constant 0 : index
    %c0_45 = arith.constant 0 : index
    %81 = vector.load %arg11[%c0_44, %c0_45] : memref<1x32xf32, #tpu.memory_space<vmem>>, vector<1x32xf32>
    %cst_46 = arith.constant dense<0.000000e+00> : vector<1x256xf32>
    %82 = tpu.matmul %81, %80, %cst_46 {dimension_numbers = #tpu.dot_dimension_numbers<[1], [0], [0], [1], [0, 0, 1, 1], [], []>} : vector<1x32xf32>, vector<32x256xf32>, vector<1x256xf32> -> vector<1x256xf32>
    %cst_47 = arith.constant dense<0xFF800000> : vector<1xf32>
    %83 = vector.multi_reduction <maximumf>, %82, %cst_47 [1] : vector<1x256xf32> to vector<1xf32>
    %84 = vector.shape_cast %83 : vector<1xf32> to vector<1x1xf32>
    %85 = vector.broadcast %84 : vector<1x1xf32> to vector<1x256xf32>
    %86 = arith.subf %82, %85 : vector<1x256xf32>
    %87 = math.exp %86 : vector<1x256xf32>
    %cst_48 = arith.constant dense<0.000000e+00> : vector<1xf32>
    %88 = vector.multi_reduction <add>, %87, %cst_48 [1] : vector<1x256xf32> to vector<1xf32>
    %89 = vector.shape_cast %88 : vector<1xf32> to vector<1x1xf32>
    %90 = vector.broadcast %89 : vector<1x1xf32> to vector<1x256xf32>
    %91 = arith.divf %87, %90 : vector<1x256xf32>
    %cst_49 = arith.constant dense<0.000000e+00> : vector<1x8xf32>
    %92 = tpu.matmul %91, %71, %cst_49 {dimension_numbers = #tpu.dot_dimension_numbers<[1], [1], [0], [0], [0, 0, 1, 0], [], []>} : vector<1x256xf32>, vector<8x256xf32>, vector<1x8xf32> -> vector<1x8xf32>
    %93 = tpu.concatenate %65, %92 in 0 : vector<1x8xf32>, vector<1x8xf32> -> vector<2x8xf32>
    %94 = tpu.concatenate %64, %91 in 0 : vector<1x256xf32>, vector<1x256xf32> -> vector<2x256xf32>
    %95 = tpu.concatenate %93, %38 in 1 : vector<2x8xf32>, vector<2x32xf32> -> vector<2x40xf32>
    %c0_50 = arith.constant 0 : index
    %c0_51 = arith.constant 0 : index
    %96 = vector.load %arg7[%c0_50, %c0_51] : memref<40x128xf32, #tpu.memory_space<vmem>>, vector<40x128xf32>
    %cst_52 = arith.constant dense<0.000000e+00> : vector<2x128xf32>
    %97 = tpu.matmul %95, %96, %cst_52 {dimension_numbers = #tpu.dot_dimension_numbers<[1], [0], [0], [1], [0, 0, 1, 1], [], []>} : vector<2x40xf32>, vector<40x128xf32>, vector<2x128xf32> -> vector<2x128xf32>
    %c0_53 = arith.constant 0 : index
    %c0_54 = arith.constant 0 : index
    %98 = vector.load %arg8[%c0_53, %c0_54] : memref<1x128xf32, #tpu.memory_space<vmem>>, vector<1x128xf32>
    %99 = vector.broadcast %98 : vector<1x128xf32> to vector<2x128xf32>
    %100 = arith.addf %97, %99 : vector<2x128xf32>
    %101 = vector.extract_strided_slice %100 {offsets = [0, 0], sizes = [2, 32], strides = [1, 1]} : vector<2x128xf32> to vector<2x32xf32>
    %102 = arith.negf %101 : vector<2x32xf32>
    %103 = math.exp %102 : vector<2x32xf32>
    %cst_55 = arith.constant 1.000000e+00 : f32
    %104 = vector.broadcast %cst_55 : f32 to vector<2x32xf32>
    %105 = arith.addf %104, %103 : vector<2x32xf32>
    %106 = arith.divf %104, %105 : vector<2x32xf32>
    %107 = vector.extract_strided_slice %100 {offsets = [0, 32], sizes = [2, 32], strides = [1, 1]} : vector<2x128xf32> to vector<2x32xf32>
    %108 = arith.negf %107 : vector<2x32xf32>
    %109 = math.exp %108 : vector<2x32xf32>
    %cst_56 = arith.constant 1.000000e+00 : f32
    %110 = vector.broadcast %cst_56 : f32 to vector<2x32xf32>
    %111 = arith.addf %110, %109 : vector<2x32xf32>
    %112 = arith.divf %110, %111 : vector<2x32xf32>
    %113 = vector.extract_strided_slice %100 {offsets = [0, 64], sizes = [2, 32], strides = [1, 1]} : vector<2x128xf32> to vector<2x32xf32>
    %114 = vector.extract_strided_slice %100 {offsets = [0, 96], sizes = [2, 32], strides = [1, 1]} : vector<2x128xf32> to vector<2x32xf32>
    %115 = arith.mulf %106, %114 : vector<2x32xf32>
    %116 = arith.addf %113, %115 : vector<2x32xf32>
    %117 = math.tanh %116 : vector<2x32xf32>
    %cst_57 = arith.constant 1.000000e+00 : f32
    %118 = vector.broadcast %cst_57 : f32 to vector<2x32xf32>
    %119 = arith.subf %118, %112 : vector<2x32xf32>
    %120 = arith.mulf %119, %117 : vector<2x32xf32>
    %121 = arith.mulf %112, %38 : vector<2x32xf32>
    %122 = arith.addf %120, %121 : vector<2x32xf32>
    %123 = vector.broadcast %3 : vector<2x1xf32> to vector<2x32xf32>
    %124 = arith.mulf %123, %122 : vector<2x32xf32>
    %cst_58 = arith.constant 1.000000e+00 : f32
    %125 = vector.broadcast %cst_58 : f32 to vector<2x1xf32>
    %126 = arith.subf %125, %3 : vector<2x1xf32>
    %127 = vector.broadcast %126 : vector<2x1xf32> to vector<2x32xf32>
    %128 = arith.mulf %127, %38 : vector<2x32xf32>
    %129 = arith.addf %124, %128 : vector<2x32xf32>
    %130 = tpu.concatenate %93, %129 in 1 : vector<2x8xf32>, vector<2x32xf32> -> vector<2x40xf32>
    %c0_59 = arith.constant 0 : index
    %c0_60 = arith.constant 0 : index
    %131 = vector.load %arg12[%c0_59, %c0_60] : memref<40x32xf32, #tpu.memory_space<vmem>>, vector<40x32xf32>
    %cst_61 = arith.constant dense<0.000000e+00> : vector<2x32xf32>
    %132 = tpu.matmul %130, %131, %cst_61 {dimension_numbers = #tpu.dot_dimension_numbers<[1], [0], [0], [1], [0, 0, 1, 1], [], []>} : vector<2x40xf32>, vector<40x32xf32>, vector<2x32xf32> -> vector<2x32xf32>
    %c0_62 = arith.constant 0 : index
    %c0_63 = arith.constant 0 : index
    %133 = vector.load %arg13[%c0_62, %c0_63] : memref<1x32xf32, #tpu.memory_space<vmem>>, vector<1x32xf32>
    %134 = vector.broadcast %133 : vector<1x32xf32> to vector<2x32xf32>
    %135 = arith.addf %132, %134 : vector<2x32xf32>
    %136 = arith.addf %135, %1 : vector<2x32xf32>
    %137 = vector.extract_strided_slice %136 {offsets = [0, 0], sizes = [2, 16], strides = [1, 1]} : vector<2x32xf32> to vector<2x16xf32>
    %138 = vector.extract_strided_slice %136 {offsets = [0, 16], sizes = [2, 16], strides = [1, 1]} : vector<2x32xf32> to vector<2x16xf32>
    %139 = arith.maximumf %137, %138 : vector<2x16xf32>
    %c0_64 = arith.constant 0 : index
    %c0_65 = arith.constant 0 : index
    %140 = vector.load %arg14[%c0_64, %c0_65] : memref<16x8xf32, #tpu.memory_space<vmem>>, vector<16x8xf32>
    %cst_66 = arith.constant dense<0.000000e+00> : vector<2x8xf32>
    %141 = tpu.matmul %139, %140, %cst_66 {dimension_numbers = #tpu.dot_dimension_numbers<[1], [0], [0], [1], [0, 0, 1, 1], [], []>} : vector<2x16xf32>, vector<16x8xf32>, vector<2x8xf32> -> vector<2x8xf32>
    %c0_67 = arith.constant 0 : index
    %c0_68 = arith.constant 0 : index
    %142 = vector.load %arg15[%c0_67, %c0_68] : memref<1x8xf32, #tpu.memory_space<vmem>>, vector<1x8xf32>
    %143 = vector.broadcast %142 : vector<1x8xf32> to vector<2x8xf32>
    %144 = arith.addf %141, %143 : vector<2x8xf32>
    %c0_69 = arith.constant 0 : index
    %c0_70 = arith.constant 0 : index
    %145 = vector.load %arg16[%c0_69, %c0_70] : memref<2x296xf32, #tpu.memory_space<vmem>>, vector<2x8xf32>
    tpu.vector_store %arg16[%c0_69, %c0_70], %144 {strides = array<i32>} : memref<2x296xf32, #tpu.memory_space<vmem>>, vector<2x8xf32>,
    %c0_71 = arith.constant 0 : index
    %c8 = arith.constant 8 : index
    %146 = vector.load %arg16[%c0_71, %c8] : memref<2x296xf32, #tpu.memory_space<vmem>>, vector<2x32xf32>
    tpu.vector_store %arg16[%c0_71, %c8], %129 {strides = array<i32>} : memref<2x296xf32, #tpu.memory_space<vmem>>, vector<2x32xf32>,
    %c0_72 = arith.constant 0 : index
    %c40 = arith.constant 40 : index
    %147 = vector.load %arg16[%c0_72, %c40] : memref<2x296xf32, #tpu.memory_space<vmem>>, vector<2x256xf32>
    tpu.vector_store %arg16[%c0_72, %c40], %94 {strides = array<i32>} : memref<2x296xf32, #tpu.memory_space<vmem>>, vector<2x256xf32>,
    return
  }
  func.func @transform_0(%arg0: i32) -> (i32, i32) {
    %c0_i32 = arith.constant 0 : i32
    %c0_i32_0 = arith.constant 0 : i32
    return %arg0, %c0_i32 : i32, i32
  }
  func.func @transform_1(%arg0: i32) -> (i32, i32, i32) {
    %c0_i32 = arith.constant 0 : i32
    %c0_i32_0 = arith.constant 0 : i32
    %c0_i32_1 = arith.constant 0 : i32
    return %arg0, %c0_i32, %c0_i32_0 : i32, i32, i32
  }
  func.func @transform_2(%arg0: i32) -> (i32, i32, i32) {
    %c0_i32 = arith.constant 0 : i32
    %c0_i32_0 = arith.constant 0 : i32
    %c0_i32_1 = arith.constant 0 : i32
    return %arg0, %c0_i32, %c0_i32_0 : i32, i32, i32
  }
  func.func @transform_3(%arg0: i32) -> (i32, i32, i32) {
    %c0_i32 = arith.constant 0 : i32
    %c0_i32_0 = arith.constant 0 : i32
    %c0_i32_1 = arith.constant 0 : i32
    return %arg0, %c0_i32, %c0_i32_0 : i32, i32, i32
  }
  func.func @transform_4(%arg0: i32) -> (i32, i32) {
    %c0_i32 = arith.constant 0 : i32
    %c0_i32_0 = arith.constant 0 : i32
    %c0_i32_1 = arith.constant 0 : i32
    return %c0_i32, %c0_i32_0 : i32, i32
  }
  func.func @transform_5(%arg0: i32) -> (i32, i32) {
    %c0_i32 = arith.constant 0 : i32
    %c0_i32_0 = arith.constant 0 : i32
    %c0_i32_1 = arith.constant 0 : i32
    return %c0_i32, %c0_i32_0 : i32, i32
  }
  func.func @transform_6(%arg0: i32) -> (i32, i32) {
    %c0_i32 = arith.constant 0 : i32
    %c0_i32_0 = arith.constant 0 : i32
    %c0_i32_1 = arith.constant 0 : i32
    return %c0_i32, %c0_i32_0 : i32, i32
  }
  func.func @transform_7(%arg0: i32) -> (i32, i32) {
    %c0_i32 = arith.constant 0 : i32
    %c0_i32_0 = arith.constant 0 : i32
    %c0_i32_1 = arith.constant 0 : i32
    return %c0_i32, %c0_i32_0 : i32, i32
  }
  func.func @transform_8(%arg0: i32) -> (i32, i32) {
    %c0_i32 = arith.constant 0 : i32
    %c0_i32_0 = arith.constant 0 : i32
    %c0_i32_1 = arith.constant 0 : i32
    return %c0_i32, %c0_i32_0 : i32, i32
  }
  func.func @transform_9(%arg0: i32) -> (i32, i32) {
    %c0_i32 = arith.constant 0 : i32
    %c0_i32_0 = arith.constant 0 : i32
    %c0_i32_1 = arith.constant 0 : i32
    return %c0_i32, %c0_i32_0 : i32, i32
  }
  func.func @transform_10(%arg0: i32) -> (i32, i32) {
    %c0_i32 = arith.constant 0 : i32
    %c0_i32_0 = arith.constant 0 : i32
    %c0_i32_1 = arith.constant 0 : i32
    return %c0_i32, %c0_i32_0 : i32, i32
  }
  func.func @transform_11(%arg0: i32) -> (i32, i32) {
    %c0_i32 = arith.constant 0 : i32
    %c0_i32_0 = arith.constant 0 : i32
    %c0_i32_1 = arith.constant 0 : i32
    return %c0_i32, %c0_i32_0 : i32, i32
  }
  func.func @transform_12(%arg0: i32) -> (i32, i32) {
    %c0_i32 = arith.constant 0 : i32
    %c0_i32_0 = arith.constant 0 : i32
    %c0_i32_1 = arith.constant 0 : i32
    return %c0_i32, %c0_i32_0 : i32, i32
  }
  func.func @transform_13(%arg0: i32) -> (i32, i32) {
    %c0_i32 = arith.constant 0 : i32
    %c0_i32_0 = arith.constant 0 : i32
    %c0_i32_1 = arith.constant 0 : i32
    return %c0_i32, %c0_i32_0 : i32, i32
  }
  func.func @transform_14(%arg0: i32) -> (i32, i32) {
    %c0_i32 = arith.constant 0 : i32
    %c0_i32_0 = arith.constant 0 : i32
    %c0_i32_1 = arith.constant 0 : i32
    return %c0_i32, %c0_i32_0 : i32, i32
  }
  func.func @transform_15(%arg0: i32) -> (i32, i32) {
    %c0_i32 = arith.constant 0 : i32
    %c0_i32_0 = arith.constant 0 : i32
    return %arg0, %c0_i32 : i32, i32
  }
}

</mosaic_0001>

<llo_original>
// kernel: tpu_custom_call.1
$region0: #{tpu_custom_call.1}
  #allocation0 [shape = 'u32[]', space=smem, size = 0x4, offset = 0x4, fixed_abs, tag = 'smem constant byte address 0x4 - core index']
  #allocation1 [shape = 'u32[72,128]{1,0:T(1,128)}', space=vmem, size = 0x9000, scoped, tag = 'internal scratch']
  %s0 = inlined_call_operand.vmem [shape: f32[2,65], index: 0, kind: input, shape index: {}]
  %s1 = inlined_call_operand.vmem [shape: f32[2,8,256], index: 1, kind: input, shape index: {}]
  %s2 = inlined_call_operand.vmem [shape: f32[2,32,256], index: 2, kind: input, shape index: {}]
  %s3 = inlined_call_operand.vmem [shape: f32[2,9,256], index: 3, kind: input, shape index: {}]
  %s4 = inlined_call_operand.hbm [shape: f32[64,128], index: 4, kind: input, shape index: {}]
  %s5 = inlined_call_operand.vmem [shape: f32[1,128], index: 5, kind: input, shape index: {}]
  %s6 = inlined_call_operand.hbm [shape: f32[40,128], index: 6, kind: input, shape index: {}]
  %s7 = inlined_call_operand.vmem [shape: f32[1,128], index: 7, kind: input, shape index: {}]
  %s8 = inlined_call_operand.hbm [shape: f32[32,32], index: 8, kind: input, shape index: {}]
  %s9 = inlined_call_operand.vmem [shape: f32[32,9], index: 9, kind: input, shape index: {}]
  %s10 = inlined_call_operand.hbm [shape: f32[1,32], index: 10, kind: input, shape index: {}]
  %s11 = inlined_call_operand.vmem [shape: f32[40,32], index: 11, kind: input, shape index: {}]
  %s12 = inlined_call_operand.hbm [shape: f32[1,32], index: 12, kind: input, shape index: {}]
  %s13 = inlined_call_operand.vmem [shape: f32[16,8], index: 13, kind: input, shape index: {}]
  %s14 = inlined_call_operand.hbm [shape: f32[1,8], index: 14, kind: input, shape index: {}]
  %s15 = inlined_call_operand.hbm [shape: f32[2,296], index: 15, kind: output, shape index: {}]
  %s16 = sld [smem:[#allocation0]]
  $region94: #{tpu_custom_call.1} parent=0
    _
  %s18 = ssub.s32 1, %s16
  %s19 = scalar_select 0, %s18, %s16
  $region1: #{tpu_custom_call.1} parent=0
    #allocation2 [shape = 'u8[32768]{0}', space=vmem, size = 0x8000, scoped, tag = 'input window, operand 4, single buffered']
    #allocation3 [shape = 's32[1]{0}', space=sflag, size = 0x4, scoped, tag = 'scoped memory for tpu_custom_call.1']
    #allocation4 [shape = 's32[1]{0}', space=sflag, size = 0x4, scoped, tag = 'scoped memory for tpu_custom_call.1']
    #allocation5 [shape = 'u8[20480]{0}', space=vmem, size = 0x5000, scoped, tag = 'input window, operand 6, single buffered']
    #allocation6 [shape = 's32[1]{0}', space=sflag, size = 0x4, scoped, tag = 'scoped memory for tpu_custom_call.1']
    #allocation7 [shape = 'u8[16384]{0}', space=vmem, size = 0x4000, scoped, tag = 'input window, operand 8, single buffered']
    #allocation8 [shape = 'u8[512]{0}', space=vmem, size = 0x400, scoped, tag = 'input window, operand 10, single buffered']
    #allocation9 [shape = 's32[1]{0}', space=sflag, size = 0x4, scoped, tag = 'scoped memory for tpu_custom_call.1']
    #allocation10 [shape = 'u8[512]{0}', space=vmem, size = 0x400, scoped, tag = 'input window, operand 12, single buffered']
    #allocation11 [shape = 'u8[512]{0}', space=vmem, size = 0x400, scoped, tag = 'input window, operand 14, single buffered']
    #allocation12 [shape = 's32[1]{0}', space=sflag, size = 0x4, scoped, tag = 'scoped memory for tpu_custom_call.1']
    #allocation13 [shape = 'u8[3072]{0}', space=vmem, size = 0xc00, scoped, tag = 'output window, operand 0, single buffered']
    %20 = vsyncpa [#allocation3], 0
    %21 = vsyncpa [#allocation6], 0
    %22 = vsyncpa [#allocation9], 0
    %23 = vsyncpa [#allocation12], 0
    %24 = vsyncpa [#allocation4], 0
    // Predicated region
    $region2: #{tpu_custom_call.1} parent=1 // pred_check
      _
    $region3: #{tpu_custom_call.1} parent=1 // pred_check_branch
      %26 = sbr.rel (0) target = $region5
    $region4: #{tpu_custom_call.1} parent=1 // pred_region
      _
    $region5: #{tpu_custom_call.1} parent=1 // pred_fallthru
      _
    // Predicated region
    $region6: #{tpu_custom_call.1} parent=1 // pred_check
      _
    $region7: #{tpu_custom_call.1} parent=1 // pred_check_branch
      %28 = sbr.rel (0) target = $region9
    $region8: #{tpu_custom_call.1} parent=1 // pred_region
      _
    $region9: #{tpu_custom_call.1} parent=1 // pred_fallthru
      _
    // Predicated region
    $region10: #{tpu_custom_call.1} parent=1 // pred_check
      _
    $region11: #{tpu_custom_call.1} parent=1 // pred_check_branch
      %30 = sbr.rel (0) target = $region13
    $region12: #{tpu_custom_call.1} parent=1 // pred_region
      _
    $region13: #{tpu_custom_call.1} parent=1 // pred_fallthru
      _
    // Predicated region
    $region14: #{tpu_custom_call.1} parent=1 // pred_check
      _
    $region15: #{tpu_custom_call.1} parent=1 // pred_check_branch
      %32 = sbr.rel (0) target = $region17
    $region16: #{tpu_custom_call.1} parent=1 // pred_region
      _
    $region17: #{tpu_custom_call.1} parent=1 // pred_fallthru
      _
    // Predicated region
    $region18: #{tpu_custom_call.1} parent=1 // pred_check
      _
    $region19: #{tpu_custom_call.1} parent=1 // pred_check_branch
      %34 = sbr.rel (0) target = $region21
    $region20: #{tpu_custom_call.1} parent=1 // pred_region
      %36 = vsyncadd [#allocation3], 0
      %s37 = sshll.u32 %s4, 4
      %s38 = int_to_ptr.hbm [resolvable:$true] %s37
      %s39 = sshll.u32 [#allocation2], 4
      %s40 = int_to_ptr.vmem [resolvable:$true] %s39
      %45 = dma.hbm_to_vmem [thread:$0]  %s38, 1024, %s40, [#allocation3], 128, 128, 8
    $region21: #{tpu_custom_call.1} parent=1 // pred_fallthru
      _
    // Predicated region
    $region22: #{tpu_custom_call.1} parent=1 // pred_check
      _
    $region23: #{tpu_custom_call.1} parent=1 // pred_check_branch
      %47 = sbr.rel (0) target = $region25
    $region24: #{tpu_custom_call.1} parent=1 // pred_region
      _
    $region25: #{tpu_custom_call.1} parent=1 // pred_fallthru
      _
    // Predicated region
    $region26: #{tpu_custom_call.1} parent=1 // pred_check
      _
    $region27: #{tpu_custom_call.1} parent=1 // pred_check_branch
      %49 = sbr.rel (0) target = $region29
    $region28: #{tpu_custom_call.1} parent=1 // pred_region
      %51 = vsyncadd [#allocation6], 0
      %s52 = sshll.u32 %s6, 4
      %s53 = int_to_ptr.hbm [resolvable:$true] %s52
      %s54 = sshll.u32 [#allocation5], 4
      %s55 = int_to_ptr.vmem [resolvable:$true] %s54
      %60 = dma.hbm_to_vmem [thread:$0]  %s53, 640, %s55, [#allocation6], 128, 128, 8
    $region29: #{tpu_custom_call.1} parent=1 // pred_fallthru
      _
    // Predicated region
    $region30: #{tpu_custom_call.1} parent=1 // pred_check
      _
    $region31: #{tpu_custom_call.1} parent=1 // pred_check_branch
      %62 = sbr.rel (0) target = $region33
    $region32: #{tpu_custom_call.1} parent=1 // pred_region
      _
    $region33: #{tpu_custom_call.1} parent=1 // pred_fallthru
      _
    // Predicated region
    $region34: #{tpu_custom_call.1} parent=1 // pred_check
      _
    $region35: #{tpu_custom_call.1} parent=1 // pred_check_branch
      %64 = sbr.rel (0) target = $region37
    $region36: #{tpu_custom_call.1} parent=1 // pred_region
      %66 = vsyncadd [#allocation6], 0
      %s67 = sshll.u32 %s8, 4
      %s68 = int_to_ptr.hbm [resolvable:$true] %s67
      %s69 = sshll.u32 [#allocation7], 4
      %s70 = int_to_ptr.vmem [resolvable:$true] %s69
      %75 = dma.hbm_to_vmem [thread:$0]  %s68, 512, %s70, [#allocation6], 128, 128, 8
    $region37: #{tpu_custom_call.1} parent=1 // pred_fallthru
      _
    // Predicated region
    $region38: #{tpu_custom_call.1} parent=1 // pred_check
      _
    $region39: #{tpu_custom_call.1} parent=1 // pred_check_branch
      %77 = sbr.rel (0) target = $region41
    $region40: #{tpu_custom_call.1} parent=1 // pred_region
      _
    $region41: #{tpu_custom_call.1} parent=1 // pred_fallthru
      _
    // Predicated region
    $region42: #{tpu_custom_call.1} parent=1 // pred_check
      _
    $region43: #{tpu_custom_call.1} parent=1 // pred_check_branch
      %79 = sbr.rel (0) target = $region45
    $region44: #{tpu_custom_call.1} parent=1 // pred_region
      %81 = vsyncadd [#allocation9], 0
      %s83 = sshll.u32 %s10, 4
      %s84 = int_to_ptr.hbm [resolvable:$true] %s83
      %s85 = sshll.u32 [#allocation8], 4
      %s86 = int_to_ptr.vmem [resolvable:$true] %s85
      %88 = dma.hbm_to_vmem [thread:$0]  %s84, 16, %s86, [#allocation9]
    $region45: #{tpu_custom_call.1} parent=1 // pred_fallthru
      _
    // Predicated region
    $region46: #{tpu_custom_call.1} parent=1 // pred_check
      _
    $region47: #{tpu_custom_call.1} parent=1 // pred_check_branch
      %90 = sbr.rel (0) target = $region49
    $region48: #{tpu_custom_call.1} parent=1 // pred_region
      _
    $region49: #{tpu_custom_call.1} parent=1 // pred_fallthru
      _
    // Predicated region
    $region50: #{tpu_custom_call.1} parent=1 // pred_check
      _
    $region51: #{tpu_custom_call.1} parent=1 // pred_check_branch
      %92 = sbr.rel (0) target = $region53
    $region52: #{tpu_custom_call.1} parent=1 // pred_region
      %94 = vsyncadd [#allocation9], 0
      %s96 = sshll.u32 %s12, 4
      %s97 = int_to_ptr.hbm [resolvable:$true] %s96
      %s98 = sshll.u32 [#allocation10], 4
      %s99 = int_to_ptr.vmem [resolvable:$true] %s98
      %101 = dma.hbm_to_vmem [thread:$0]  %s97, 16, %s99, [#allocation9]
    $region53: #{tpu_custom_call.1} parent=1 // pred_fallthru
      _
    // Predicated region
    $region54: #{tpu_custom_call.1} parent=1 // pred_check
      _
    $region55: #{tpu_custom_call.1} parent=1 // pred_check_branch
      %103 = sbr.rel (0) target = $region57
    $region56: #{tpu_custom_call.1} parent=1 // pred_region
      _
    $region57: #{tpu_custom_call.1} parent=1 // pred_fallthru
      _
    // Predicated region
    $region58: #{tpu_custom_call.1} parent=1 // pred_check
      _
    $region59: #{tpu_custom_call.1} parent=1 // pred_check_branch
      %105 = sbr.rel (0) target = $region61
    $region60: #{tpu_custom_call.1} parent=1 // pred_region
      %107 = vsyncadd [#allocation12], 0
      %s109 = sshll.u32 %s14, 4
      %s110 = int_to_ptr.hbm [resolvable:$true] %s109
      %s111 = sshll.u32 [#allocation11], 4
      %s112 = int_to_ptr.vmem [resolvable:$true] %s111
      %114 = dma.hbm_to_vmem [thread:$0]  %s110, 16, %s112, [#allocation12]
    $region61: #{tpu_custom_call.1} parent=1 // pred_fallthru
      _
    // Predicated region
    $region62: #{tpu_custom_call.1} parent=1 // pred_check
      _
    $region63: #{tpu_custom_call.1} parent=1 // pred_check_branch
      %116 = sbr.rel (0) target = $region65
    $region64: #{tpu_custom_call.1} parent=1 // pred_region
      %118 = dma.done [#allocation3], 1024
    $region65: #{tpu_custom_call.1} parent=1 // pred_fallthru
      _
    // Predicated region
    $region66: #{tpu_custom_call.1} parent=1 // pred_check
      _
    $region67: #{tpu_custom_call.1} parent=1 // pred_check_branch
      %120 = sbr.rel (0) target = $region69
    $region68: #{tpu_custom_call.1} parent=1 // pred_region
      %122 = dma.done [#allocation6], 640
    $region69: #{tpu_custom_call.1} parent=1 // pred_fallthru
      _
    // Predicated region
    $region70: #{tpu_custom_call.1} parent=1 // pred_check
      _
    $region71: #{tpu_custom_call.1} parent=1 // pred_check_branch
      %124 = sbr.rel (0) target = $region73
    $region72: #{tpu_custom_call.1} parent=1 // pred_region
      %126 = dma.done [#allocation6], 512
    $region73: #{tpu_custom_call.1} parent=1 // pred_fallthru
      _
    // Predicated region
    $region74: #{tpu_custom_call.1} parent=1 // pred_check
      _
    $region75: #{tpu_custom_call.1} parent=1 // pred_check_branch
      %128 = sbr.rel (0) target = $region77
    $region76: #{tpu_custom_call.1} parent=1 // pred_region
      %130 = dma.done [#allocation9], 16
    $region77: #{tpu_custom_call.1} parent=1 // pred_fallthru
      _
    // Predicated region
    $region78: #{tpu_custom_call.1} parent=1 // pred_check
      _
    $region79: #{tpu_custom_call.1} parent=1 // pred_check_branch
      %132 = sbr.rel (0) target = $region81
    $region80: #{tpu_custom_call.1} parent=1 // pred_region
      %134 = dma.done [#allocation9], 16
    $region81: #{tpu_custom_call.1} parent=1 // pred_fallthru
      _
    // Predicated region
    $region82: #{tpu_custom_call.1} parent=1 // pred_check
      _
    $region83: #{tpu_custom_call.1} parent=1 // pred_check_branch
      %136 = sbr.rel (0) target = $region85
    $region84: #{tpu_custom_call.1} parent=1 // pred_region
      %138 = dma.done [#allocation12], 16
    $region85: #{tpu_custom_call.1} parent=1 // pred_fallthru
      _
    %v139 = vld [vmem:[%s0] sm:$0x3]
    %v140 = vld [vmem:[#allocation2] sm:$0xff]
    %v141 = vld [vmem:[#allocation2 + $0x8] sm:$0xff]
    %v142 = vld [vmem:[#allocation2 + $0x10] sm:$0xff]
    %v143 = vld [vmem:[#allocation2 + $0x18] sm:$0xff]
    %v144 = vld [vmem:[#allocation2 + $0x20] sm:$0xff]
    %v145 = vld [vmem:[#allocation2 + $0x28] sm:$0xff]
    %v146 = vld [vmem:[#allocation2 + $0x30] sm:$0xff]
    %v147 = vld [vmem:[#allocation2 + $0x38] sm:$0xff]
    %v148 = vld [vmem:[%s5] sm:$0x1]
    %v150 = vperm.slane %v148, 0
    %vm152 = vcmask 523264
    %v154 = vsel %vm152, %v139, 0
    %156 = vmatpush.msra.mxu0 0.0
    %157 = vmatpush.msra.mxu0 0.0
    %158 = vmatpush.msra.mxu0 0.0
    %159 = vmatpush.msra.mxu0 0.0
    %160 = vmatpush.msra.mxu0 0.0
    %161 = vmatpush.msra.mxu0 0.0
    %162 = vmatpush.msra.mxu0 0.0
    %163 = vmatpush.msra.mxu0 0.0
    %164 = vmatpush.msra.mxu0 %v147
    %165 = vmatpush.msra.mxu0 %v146
    %166 = vmatpush.msra.mxu0 %v145
    %167 = vmatpush.msra.mxu0 %v144
    %168 = vmatpush.msra.mxu0 %v143
    %169 = vmatpush.msra.mxu0 %v142
    %170 = vmatpush.msra.mxu0 %v141
    %171 = vmatpush.msra.mxu0 %v140
    %172 = vmatmul.f32.gmra.mxu0 %v154
    %v173 = vpop.f32.mrf.mxu0
    %v174 = vadd.f32 %v150, %v173
    %175 = vdwg.mxu0
    %v176 = vxor.u32 %v174, 2147483648
    %v177 = vmul.f32 %v176, 1.442695
    %v178 = vpow.pop %v177
    %v179 = vadd.f32 %v178, 1.0
    %v180 = vrcp.pop %v179
    %v181 = vmul.f32 %v179, %v180
    %v182 = vsub.f32 1.0, %v181
    %v183 = vmul.f32 %v180, %v182
    %v184 = vadd.f32 %v180, %v183
    %vm185 = vweird.f32 %v179
    %vm186 = vweird.f32 %v180
    %vm187 = vmor %vm185, %vm186
    %v188 = vsel %vm187, %v180, %v184
    %v189 = vand.u32 2147483647, %v179
    %vm190 = vcmp.eq.f32.partialorder %v189, 8.507059e+37
    %v191 = vand.u32 %v179, 2147483648
    %v192 = vor.u32 1.1754944e-38, %v191
    %v193 = vsel %vm190, %v192, %v188
    %v194 = vmul.f32 1.0, %v193
    %196 = vrot.lane.b32.xlu0 %v174, 32
    %v197 = vpop.permute.xlu0 %196
    %v199 = vmul.f32 %v194, %v197
    %201 = vrot.lane.b32.xlu0 %v199, 64
    %v202 = vpop.permute.xlu0 %201
    %v204 = vadd.f32 %v174, %v202
    %v205 = vtanh.pop %v204
    %v206 = vsub.f32 1.0, %v194
    %208 = vrot.lane.b32.xlu0 %v205, 96
    %v209 = vpop.permute.xlu0 %208
    %v211 = vmul.f32 %v206, %v209
    %v212 = vmul.f32 %v194, %v139
    %v213 = vadd.f32 %v211, %v212
    %214 = vset.pattern.permute.xlu0 64
    %215 = vperm.xlu0 %214, %v139
    %v216 = vpop.permute.xlu0 %215
    %v218 = vmul.f32 %v216, %v213
    %v219 = vsub.f32 1.0, %v139
    %221 = vset.pattern.permute.xlu0 64
    %222 = vperm.xlu0 %221, %v219
    %v223 = vpop.permute.xlu0 %222
    %v225 = vmul.f32 %v223, %v139
    %v226 = vadd.f32 %v218, %v225
    %v227 = vld [vmem:[%s2] sm:$0xff]
    %v228 = vld [vmem:[%s2 + $0x8] sm:$0xff]
    %v229 = vld [vmem:[%s2 + $0x10] sm:$0xff]
    %v230 = vld [vmem:[%s2 + $0x18] sm:$0xff]
    %v231 = vld [vmem:[%s2 + $0x20] sm:$0xff]
    %v232 = vld [vmem:[%s2 + $0x28] sm:$0xff]
    %v233 = vld [vmem:[%s2 + $0x30] sm:$0xff]
    %v234 = vld [vmem:[%s2 + $0x38] sm:$0xff]
    %v235 = vld [vmem:[%s3] sm:$0xff]
    %v236 = vld [vmem:[%s3 + $0x8] sm:$0xff]
    %v237 = vld [vmem:[%s3 + $0x10] sm:$0x1]
    %v238 = vld [vmem:[%s3 + $0x18] sm:$0x1]
    %v239 = vld [vmem:[%s1] sm:$0xff]
    %v240 = vld [vmem:[%s1 + $0x8] sm:$0xff]
    %v241 = vld [vmem:[%s9] sm:$0xff]
    %v242 = vld [vmem:[%s9 + $0x8] sm:$0xff]
    %v243 = vld [vmem:[%s9 + $0x10] sm:$0xff]
    %v244 = vld [vmem:[%s9 + $0x18] sm:$0xff]
    %vm245 = vcmask 72704
    %v247 = vsel %vm245, %v241, 0
    %v250 = vsel %vm245, %v242, 0
    %v253 = vsel %vm245, %v243, 0
    %v256 = vsel %vm245, %v244, 0
    %vm258 = vcmask 1040384
    %v260 = vsel %vm258, %v237, 0
    %v263 = vsel %vm258, %v238, 0
    %265 = vmatpush.msra.mxu0 0.0
    %266 = vmatpush.msra.mxu0 0.0
    %267 = vmatpush.msra.mxu0 0.0
    %268 = vmatpush.msra.mxu0 0.0
    %269 = vmatpush.msra.mxu0 0.0
    %270 = vmatpush.msra.mxu0 0.0
    %271 = vmatpush.msra.mxu0 0.0
    %272 = vmatpush.msra.mxu0 0.0
    %273 = vmatpush.msra.mxu0 0.0
    %274 = vmatpush.msra.mxu0 0.0
    %275 = vmatpush.msra.mxu0 0.0
    %276 = vmatpush.msra.mxu0 0.0
    %277 = vmatpush.msra.mxu0 0.0
    %278 = vmatpush.msra.mxu0 0.0
    %279 = vmatpush.msra.mxu0 %v260
    %280 = vmatpush.msra.mxu0 %v235
    %281 = vmatmul.f32.gmra.mxu0 %v247
    %v282 = vpop.f32.mrf.mxu0
    %v283 = vadd.f32 0.0, %v282
    %284 = vmatmul.f32.gmra.mxu0 %v250
    %v285 = vpop.f32.mrf.mxu0
    %v286 = vadd.f32 0.0, %v285
    %287 = vmatmul.f32.gmra.mxu0 %v253
    %v288 = vpop.f32.mrf.mxu0
    %v289 = vadd.f32 0.0, %v288
    %290 = vmatmul.f32.gmra.mxu0 %v256
    %v291 = vpop.f32.mrf.mxu0
    %v292 = vadd.f32 0.0, %v291
    %293 = vdwg.mxu0
    %294 = vmatpush.msra.mxu0 0.0
    %295 = vmatpush.msra.mxu0 0.0
    %296 = vmatpush.msra.mxu0 0.0
    %297 = vmatpush.msra.mxu0 0.0
    %298 = vmatpush.msra.mxu0 0.0
    %299 = vmatpush.msra.mxu0 0.0
    %300 = vmatpush.msra.mxu0 0.0
    %301 = vmatpush.msra.mxu0 0.0
    %302 = vmatpush.msra.mxu0 0.0
    %303 = vmatpush.msra.mxu0 0.0
    %304 = vmatpush.msra.mxu0 0.0
    %305 = vmatpush.msra.mxu0 0.0
    %306 = vmatpush.msra.mxu0 0.0
    %307 = vmatpush.msra.mxu0 0.0
    %308 = vmatpush.msra.mxu0 %v263
    %309 = vmatpush.msra.mxu0 %v236
    %310 = vmatmul.f32.gmra.mxu0 %v247
    %v311 = vpop.f32.mrf.mxu0
    %v312 = vadd.f32 0.0, %v311
    %313 = vmatmul.f32.gmra.mxu0 %v250
    %v314 = vpop.f32.mrf.mxu0
    %v315 = vadd.f32 0.0, %v314
    %316 = vmatmul.f32.gmra.mxu0 %v253
    %v317 = vpop.f32.mrf.mxu0
    %v318 = vadd.f32 0.0, %v317
    %319 = vmatmul.f32.gmra.mxu0 %v256
    %v320 = vpop.f32.mrf.mxu0
    %v321 = vadd.f32 0.0, %v320
    %322 = vdwg.mxu0
    %v323 = vld [vmem:[#allocation7] sm:$0xff]
    %v324 = vld [vmem:[#allocation7 + $0x8] sm:$0xff]
    %v325 = vld [vmem:[#allocation7 + $0x10] sm:$0xff]
    %v326 = vld [vmem:[#allocation7 + $0x18] sm:$0xff]
    %v327 = vperm.slane %v226, 0
    %329 = vrot.lane.b32.xlu0 %v327, 96
    %v330 = vpop.permute.xlu0 %329
    %v332 = vmul.f32 %v323, %v330
    %v333 = vmul.f32 %v324, %v330
    %v334 = vmul.f32 %v325, %v330
    %v335 = vmul.f32 %v326, %v330
    %vm336 = vcmask 261120
    %v337 = vsel %vm336, %v332, 0.0
    %338 = vadd.xlane.f32.xlu0 %v337
    %v339 = vpop.xlane.xlu0 %338
    %v340 = vsel %vm336, %v333, 0.0
    %341 = vadd.xlane.f32.xlu0 %v340
    %v342 = vpop.xlane.xlu0 %341
    %v343 = vsel %vm336, %v334, 0.0
    %344 = vadd.xlane.f32.xlu0 %v343
    %v345 = vpop.xlane.xlu0 %344
    %v346 = vsel %vm336, %v335, 0.0
    %347 = vadd.xlane.f32.xlu0 %v346
    %v348 = vpop.xlane.xlu0 %347
    %v349 = vadd.f32 %v227, %v283
    %v350 = vadd.f32 %v228, %v312
    %v351 = vadd.f32 %v229, %v286
    %v352 = vadd.f32 %v230, %v315
    %v353 = vadd.f32 %v231, %v289
    %v354 = vadd.f32 %v232, %v318
    %v355 = vadd.f32 %v233, %v292
    %v356 = vadd.f32 %v234, %v321
    %v357 = vadd.f32 %v349, %v339
    %v358 = vadd.f32 %v350, %v339
    %v359 = vadd.f32 %v351, %v342
    %v360 = vadd.f32 %v352, %v342
    %v361 = vadd.f32 %v353, %v345
    %v362 = vadd.f32 %v354, %v345
    %v363 = vadd.f32 %v355, %v348
    %v364 = vadd.f32 %v356, %v348
    %v365 = vtanh.pop %v357
    %v366 = vtanh.pop %v358
    %v367 = vtanh.pop %v359
    %v368 = vtanh.pop %v360
    %v369 = vtanh.pop %v361
    %v370 = vtanh.pop %v362
    %v371 = vtanh.pop %v363
    %v372 = vtanh.pop %v364
    %v373 = vld [vmem:[#allocation8] sm:$0x1]
    %v375 = vsel %vm336, %v373, 0
    %377 = vmatpush.msra.mxu0 0.0
    %378 = vmatpush.msra.mxu0 0.0
    %379 = vmatpush.msra.mxu0 0.0
    %380 = vmatpush.msra.mxu0 0.0
    %381 = vmatpush.msra.mxu0 0.0
    %382 = vmatpush.msra.mxu0 0.0
    %383 = vmatpush.msra.mxu0 0.0
    %384 = vmatpush.msra.mxu0 0.0
    %385 = vmatpush.msra.mxu0 0.0
    %386 = vmatpush.msra.mxu0 0.0
    %387 = vmatpush.msra.mxu0 0.0
    %388 = vmatpush.msra.mxu0 0.0
    %389 = vmatpush.msra.mxu0 %v371
    %390 = vmatpush.msra.mxu0 %v369
    %391 = vmatpush.msra.mxu0 %v367
    %392 = vmatpush.msra.mxu0 %v365
    %393 = vmatmul.f32.gmra.mxu0 %v375
    %v394 = vpop.f32.mrf.mxu0
    %v395 = vadd.f32 0.0, %v394
    %396 = vdwg.mxu0
    %397 = vmatpush.msra.mxu0 0.0
    %398 = vmatpush.msra.mxu0 0.0
    %399 = vmatpush.msra.mxu0 0.0
    %400 = vmatpush.msra.mxu0 0.0
    %401 = vmatpush.msra.mxu0 0.0
    %402 = vmatpush.msra.mxu0 0.0
    %403 = vmatpush.msra.mxu0 0.0
    %404 = vmatpush.msra.mxu0 0.0
    %405 = vmatpush.msra.mxu0 0.0
    %406 = vmatpush.msra.mxu0 0.0
    %407 = vmatpush.msra.mxu0 0.0
    %408 = vmatpush.msra.mxu0 0.0
    %409 = vmatpush.msra.mxu0 %v372
    %410 = vmatpush.msra.mxu0 %v370
    %411 = vmatpush.msra.mxu0 %v368
    %412 = vmatpush.msra.mxu0 %v366
    %413 = vmatmul.f32.gmra.mxu0 %v375
    %v414 = vpop.f32.mrf.mxu0
    %v415 = vadd.f32 0.0, %v414
    %416 = vdwg.mxu0
    %v417 = vsel %vm258, %v395, -inf
    %v418 = vsel %vm258, %v415, -inf
    %v419 = vmax.f32 %v417, %v418
    %420 = vmax.xlane.f32.xlu0 %v419
    %v421 = vpop.xlane.xlu0 %420
    %v422 = vsub.f32 %v395, %v421
    %v423 = vsub.f32 %v415, %v421
    %v424 = vmul.f32 %v422, 1.442695
    %v425 = vpow.pop %v424
    %v426 = vmul.f32 %v423, 1.442695
    %v427 = vpow.pop %v426
    %v428 = vsel %vm258, %v425, 0.0
    %v429 = vsel %vm258, %v427, 0.0
    %v430 = vadd.f32 %v428, %v429
    %431 = vadd.xlane.f32.xlu0 %v430
    %v432 = vpop.xlane.xlu0 %431
    %v433 = vrcp.pop %v432
    %v434 = vmul.f32 %v432, %v433
    %v435 = vsub.f32 1.0, %v434
    %v436 = vmul.f32 %v433, %v435
    %v437 = vadd.f32 %v433, %v436
    %vm438 = vweird.f32 %v432
    %vm439 = vweird.f32 %v433
    %vm440 = vmor %vm438, %vm439
    %v441 = vsel %vm440, %v433, %v437
    %v442 = vand.u32 2147483647, %v432
    %vm443 = vcmp.eq.f32.partialorder %v442, 8.507059e+37
    %v444 = vand.u32 %v432, 2147483648
    %v445 = vor.u32 1.1754944e-38, %v444
    %v446 = vsel %vm443, %v445, %v441
    %v447 = vmul.f32 %v425, %v446
    %v448 = vmul.f32 %v427, %v446
    %449 = vmatpush.xpose.msra.mxu0 0.0
    %450 = vmatpush.xpose.msra.mxu0 0.0
    %451 = vmatpush.xpose.msra.mxu0 0.0
    %452 = vmatpush.xpose.msra.mxu0 0.0
    %453 = vmatpush.xpose.msra.mxu0 0.0
    %454 = vmatpush.xpose.msra.mxu0 0.0
    %455 = vmatpush.xpose.msra.mxu0 0.0
    %456 = vmatpush.xpose.msra.mxu0 0.0
    %457 = vmatpush.xpose.msra.mxu0 0.0
    %458 = vmatpush.xpose.msra.mxu0 0.0
    %459 = vmatpush.xpose.msra.mxu0 0.0
    %460 = vmatpush.xpose.msra.mxu0 0.0
    %461 = vmatpush.xpose.msra.mxu0 0.0
    %462 = vmatpush.xpose.msra.mxu0 0.0
    %463 = vmatpush.xpose.msra.mxu0 0.0
    %464 = vmatpush.xpose.msra.mxu0 %v239
    %465 = vmatmul.f32.gmra.mxu0 %v447
    %v466 = vpop.f32.mrf.mxu0
    %v467 = vadd.f32 0.0, %v466
    %468 = vdwg.mxu0
    %469 = vmatpush.xpose.msra.mxu0 0.0
    %470 = vmatpush.xpose.msra.mxu0 0.0
    %471 = vmatpush.xpose.msra.mxu0 0.0
    %472 = vmatpush.xpose.msra.mxu0 0.0
    %473 = vmatpush.xpose.msra.mxu0 0.0
    %474 = vmatpush.xpose.msra.mxu0 0.0
    %475 = vmatpush.xpose.msra.mxu0 0.0
    %476 = vmatpush.xpose.msra.mxu0 0.0
    %477 = vmatpush.xpose.msra.mxu0 0.0
    %478 = vmatpush.xpose.msra.mxu0 0.0
    %479 = vmatpush.xpose.msra.mxu0 0.0
    %480 = vmatpush.xpose.msra.mxu0 0.0
    %481 = vmatpush.xpose.msra.mxu0 0.0
    %482 = vmatpush.xpose.msra.mxu0 0.0
    %483 = vmatpush.xpose.msra.mxu0 0.0
    %484 = vmatpush.xpose.msra.mxu0 %v240
    %485 = vmatmul.f32.gmra.mxu0 %v448
    %v486 = vpop.f32.mrf.mxu0
    %v487 = vadd.f32 %v467, %v486
    %488 = vdwg.mxu0
    %s489 = scalar_lea.vmem %s2, 64
    %v490 = vld [vmem:[%s489] sm:$0xff]
    %v491 = vld [vmem:[%s489 + $0x8] sm:$0xff]
    %v492 = vld [vmem:[%s489 + $0x10] sm:$0xff]
    %v493 = vld [vmem:[%s489 + $0x18] sm:$0xff]
    %v494 = vld [vmem:[%s489 + $0x20] sm:$0xff]
    %v495 = vld [vmem:[%s489 + $0x28] sm:$0xff]
    %v496 = vld [vmem:[%s489 + $0x30] sm:$0xff]
    %v497 = vld [vmem:[%s489 + $0x38] sm:$0xff]
    %s498 = scalar_lea.vmem %s3, 32
    %v499 = vld [vmem:[%s498] sm:$0xff]
    %v500 = vld [vmem:[%s498 + $0x8] sm:$0xff]
    %v501 = vld [vmem:[%s498 + $0x10] sm:$0x1]
    %v502 = vld [vmem:[%s498 + $0x18] sm:$0x1]
    %s503 = scalar_lea.vmem %s1, 16
    %v504 = vld [vmem:[%s503] sm:$0xff]
    %v505 = vld [vmem:[%s503 + $0x8] sm:$0xff]
    %v507 = vsel %vm258, %v501, 0
    %v510 = vsel %vm258, %v502, 0
    %512 = vmatpush.msra.mxu0 0.0
    %513 = vmatpush.msra.mxu0 0.0
    %514 = vmatpush.msra.mxu0 0.0
    %515 = vmatpush.msra.mxu0 0.0
    %516 = vmatpush.msra.mxu0 0.0
    %517 = vmatpush.msra.mxu0 0.0
    %518 = vmatpush.msra.mxu0 0.0
    %519 = vmatpush.msra.mxu0 0.0
    %520 = vmatpush.msra.mxu0 0.0
    %521 = vmatpush.msra.mxu0 0.0
    %522 = vmatpush.msra.mxu0 0.0
    %523 = vmatpush.msra.mxu0 0.0
    %524 = vmatpush.msra.mxu0 0.0
    %525 = vmatpush.msra.mxu0 0.0
    %526 = vmatpush.msra.mxu0 %v507
    %527 = vmatpush.msra.mxu0 %v499
    %528 = vmatmul.f32.gmra.mxu0 %v247
    %v529 = vpop.f32.mrf.mxu0
    %v530 = vadd.f32 0.0, %v529
    %531 = vmatmul.f32.gmra.mxu0 %v250
    %v532 = vpop.f32.mrf.mxu0
    %v533 = vadd.f32 0.0, %v532
    %534 = vmatmul.f32.gmra.mxu0 %v253
    %v535 = vpop.f32.mrf.mxu0
    %v536 = vadd.f32 0.0, %v535
    %537 = vmatmul.f32.gmra.mxu0 %v256
    %v538 = vpop.f32.mrf.mxu0
    %v539 = vadd.f32 0.0, %v538
    %540 = vdwg.mxu0
    %541 = vmatpush.msra.mxu0 0.0
    %542 = vmatpush.msra.mxu0 0.0
    %543 = vmatpush.msra.mxu0 0.0
    %544 = vmatpush.msra.mxu0 0.0
    %545 = vmatpush.msra.mxu0 0.0
    %546 = vmatpush.msra.mxu0 0.0
    %547 = vmatpush.msra.mxu0 0.0
    %548 = vmatpush.msra.mxu0 0.0
    %549 = vmatpush.msra.mxu0 0.0
    %550 = vmatpush.msra.mxu0 0.0
    %551 = vmatpush.msra.mxu0 0.0
    %552 = vmatpush.msra.mxu0 0.0
    %553 = vmatpush.msra.mxu0 0.0
    %554 = vmatpush.msra.mxu0 0.0
    %555 = vmatpush.msra.mxu0 %v510
    %556 = vmatpush.msra.mxu0 %v500
    %557 = vmatmul.f32.gmra.mxu0 %v247
    %v558 = vpop.f32.mrf.mxu0
    %v559 = vadd.f32 0.0, %v558
    %560 = vmatmul.f32.gmra.mxu0 %v250
    %v561 = vpop.f32.mrf.mxu0
    %v562 = vadd.f32 0.0, %v561
    %563 = vmatmul.f32.gmra.mxu0 %v253
    %v564 = vpop.f32.mrf.mxu0
    %v565 = vadd.f32 0.0, %v564
    %566 = vmatmul.f32.gmra.mxu0 %v256
    %v567 = vpop.f32.mrf.mxu0
    %v568 = vadd.f32 0.0, %v567
    %569 = vdwg.mxu0
    %v570 = vperm.slane %v226, 1
    %572 = vrot.lane.b32.xlu0 %v570, 96
    %v573 = vpop.permute.xlu0 %572
    %v575 = vmul.f32 %v323, %v573
    %v576 = vmul.f32 %v324, %v573
    %v577 = vmul.f32 %v325, %v573
    %v578 = vmul.f32 %v326, %v573
    %v579 = vsel %vm336, %v575, 0.0
    %580 = vadd.xlane.f32.xlu0 %v579
    %v581 = vpop.xlane.xlu0 %580
    %v582 = vsel %vm336, %v576, 0.0
    %583 = vadd.xlane.f32.xlu0 %v582
    %v584 = vpop.xlane.xlu0 %583
    %v585 = vsel %vm336, %v577, 0.0
    %586 = vadd.xlane.f32.xlu0 %v585
    %v587 = vpop.xlane.xlu0 %586
    %v588 = vsel %vm336, %v578, 0.0
    %589 = vadd.xlane.f32.xlu0 %v588
    %v590 = vpop.xlane.xlu0 %589
    %v591 = vadd.f32 %v490, %v530
    %v592 = vadd.f32 %v491, %v559
    %v593 = vadd.f32 %v492, %v533
    %v594 = vadd.f32 %v493, %v562
    %v595 = vadd.f32 %v494, %v536
    %v596 = vadd.f32 %v495, %v565
    %v597 = vadd.f32 %v496, %v539
    %v598 = vadd.f32 %v497, %v568
    %v599 = vadd.f32 %v591, %v581
    %v600 = vadd.f32 %v592, %v581
    %v601 = vadd.f32 %v593, %v584
    %v602 = vadd.f32 %v594, %v584
    %v603 = vadd.f32 %v595, %v587
    %v604 = vadd.f32 %v596, %v587
    %v605 = vadd.f32 %v597, %v590
    %v606 = vadd.f32 %v598, %v590
    %v607 = vtanh.pop %v599
    %v608 = vtanh.pop %v600
    %v609 = vtanh.pop %v601
    %v610 = vtanh.pop %v602
    %v611 = vtanh.pop %v603
    %v612 = vtanh.pop %v604
    %v613 = vtanh.pop %v605
    %v614 = vtanh.pop %v606
    %615 = vmatpush.msra.mxu0 0.0
    %616 = vmatpush.msra.mxu0 0.0
    %617 = vmatpush.msra.mxu0 0.0
    %618 = vmatpush.msra.mxu0 0.0
    %619 = vmatpush.msra.mxu0 0.0
    %620 = vmatpush.msra.mxu0 0.0
    %621 = vmatpush.msra.mxu0 0.0
    %622 = vmatpush.msra.mxu0 0.0
    %623 = vmatpush.msra.mxu0 0.0
    %624 = vmatpush.msra.mxu0 0.0
    %625 = vmatpush.msra.mxu0 0.0
    %626 = vmatpush.msra.mxu0 0.0
    %627 = vmatpush.msra.mxu0 %v613
    %628 = vmatpush.msra.mxu0 %v611
    %629 = vmatpush.msra.mxu0 %v609
    %630 = vmatpush.msra.mxu0 %v607
    %631 = vmatmul.f32.gmra.mxu0 %v375
    %v632 = vpop.f32.mrf.mxu0
    %v633 = vadd.f32 0.0, %v632
    %634 = vdwg.mxu0
    %635 = vmatpush.msra.mxu0 0.0
    %636 = vmatpush.msra.mxu0 0.0
    %637 = vmatpush.msra.mxu0 0.0
    %638 = vmatpush.msra.mxu0 0.0
    %639 = vmatpush.msra.mxu0 0.0
    %640 = vmatpush.msra.mxu0 0.0
    %641 = vmatpush.msra.mxu0 0.0
    %642 = vmatpush.msra.mxu0 0.0
    %643 = vmatpush.msra.mxu0 0.0
    %644 = vmatpush.msra.mxu0 0.0
    %645 = vmatpush.msra.mxu0 0.0
    %646 = vmatpush.msra.mxu0 0.0
    %647 = vmatpush.msra.mxu0 %v614
    %648 = vmatpush.msra.mxu0 %v612
    %649 = vmatpush.msra.mxu0 %v610
    %650 = vmatpush.msra.mxu0 %v608
    %651 = vmatmul.f32.gmra.mxu0 %v375
    %v652 = vpop.f32.mrf.mxu0
    %v653 = vadd.f32 0.0, %v652
    %654 = vdwg.mxu0
    %v655 = vsel %vm258, %v633, -inf
    %v656 = vsel %vm258, %v653, -inf
    %v657 = vmax.f32 %v655, %v656
    %658 = vmax.xlane.f32.xlu0 %v657
    %v659 = vpop.xlane.xlu0 %658
    %v660 = vsub.f32 %v633, %v659
    %v661 = vsub.f32 %v653, %v659
    %v662 = vmul.f32 %v660, 1.442695
    %v663 = vpow.pop %v662
    %v664 = vmul.f32 %v661, 1.442695
    %v665 = vpow.pop %v664
    %v666 = vsel %vm258, %v663, 0.0
    %v667 = vsel %vm258, %v665, 0.0
    %v668 = vadd.f32 %v666, %v667
    %669 = vadd.xlane.f32.xlu0 %v668
    %v670 = vpop.xlane.xlu0 %669
    %v671 = vrcp.pop %v670
    %v672 = vmul.f32 %v670, %v671
    %v673 = vsub.f32 1.0, %v672
    %v674 = vmul.f32 %v671, %v673
    %v675 = vadd.f32 %v671, %v674
    %vm676 = vweird.f32 %v670
    %vm677 = vweird.f32 %v671
    %vm678 = vmor %vm676, %vm677
    %v679 = vsel %vm678, %v671, %v675
    %v680 = vand.u32 2147483647, %v670
    %vm681 = vcmp.eq.f32.partialorder %v680, 8.507059e+37
    %v682 = vand.u32 %v670, 2147483648
    %v683 = vor.u32 1.1754944e-38, %v682
    %v684 = vsel %vm681, %v683, %v679
    %v685 = vmul.f32 %v663, %v684
    %v686 = vmul.f32 %v665, %v684
    %687 = vmatpush.xpose.msra.mxu0 0.0
    %688 = vmatpush.xpose.msra.mxu0 0.0
    %689 = vmatpush.xpose.msra.mxu0 0.0
    %690 = vmatpush.xpose.msra.mxu0 0.0
    %691 = vmatpush.xpose.msra.mxu0 0.0
    %692 = vmatpush.xpose.msra.mxu0 0.0
    %693 = vmatpush.xpose.msra.mxu0 0.0
    %694 = vmatpush.xpose.msra.mxu0 0.0
    %695 = vmatpush.xpose.msra.mxu0 0.0
    %696 = vmatpush.xpose.msra.mxu0 0.0
    %697 = vmatpush.xpose.msra.mxu0 0.0
    %698 = vmatpush.xpose.msra.mxu0 0.0
    %699 = vmatpush.xpose.msra.mxu0 0.0
    %700 = vmatpush.xpose.msra.mxu0 0.0
    %701 = vmatpush.xpose.msra.mxu0 0.0
    %702 = vmatpush.xpose.msra.mxu0 %v504
    %703 = vmatmul.f32.gmra.mxu0 %v685
    %v704 = vpop.f32.mrf.mxu0
    %v705 = vadd.f32 0.0, %v704
    %706 = vdwg.mxu0
    %707 = vmatpush.xpose.msra.mxu0 0.0
    %708 = vmatpush.xpose.msra.mxu0 0.0
    %709 = vmatpush.xpose.msra.mxu0 0.0
    %710 = vmatpush.xpose.msra.mxu0 0.0
    %711 = vmatpush.xpose.msra.mxu0 0.0
    %712 = vmatpush.xpose.msra.mxu0 0.0
    %713 = vmatpush.xpose.msra.mxu0 0.0
    %714 = vmatpush.xpose.msra.mxu0 0.0
    %715 = vmatpush.xpose.msra.mxu0 0.0
    %716 = vmatpush.xpose.msra.mxu0 0.0
    %717 = vmatpush.xpose.msra.mxu0 0.0
    %718 = vmatpush.xpose.msra.mxu0 0.0
    %719 = vmatpush.xpose.msra.mxu0 0.0
    %720 = vmatpush.xpose.msra.mxu0 0.0
    %721 = vmatpush.xpose.msra.mxu0 0.0
    %722 = vmatpush.xpose.msra.mxu0 %v505
    %723 = vmatmul.f32.gmra.mxu0 %v686
    %v724 = vpop.f32.mrf.mxu0
    %v725 = vadd.f32 %v705, %v724
    %726 = vdwg.mxu0
    %v728 = vrot.slane %v725, 7
    %v730 = vsel %vm258, %v487, %v728
    %v733 = vrot.slane %v685, 7
    %v734 = vrot.slane %v686, 7
    %v737 = vsel %vm258, %v447, %v733
    %v738 = vsel %vm258, %v448, %v734
    %740 = vrot.lane.b32.xlu0 %v226, 104
    %v741 = vpop.permute.xlu0 %740
    %vm743 = vcmask 64512
    %v744 = vsel %vm743, %v730, %v741
    %v745 = vld [vmem:[#allocation5] sm:$0xff]
    %v746 = vld [vmem:[#allocation5 + $0x8] sm:$0xff]
    %v747 = vld [vmem:[#allocation5 + $0x10] sm:$0xff]
    %v748 = vld [vmem:[#allocation5 + $0x18] sm:$0xff]
    %v749 = vld [vmem:[#allocation5 + $0x20] sm:$0xff]
    %v750 = vld [vmem:[%s7] sm:$0x1]
    %v752 = vperm.slane %v750, 0
    %vm754 = vcmask 326656
    %v756 = vsel %vm754, %v744, 0
    %758 = vmatpush.msra.mxu0 0.0
    %759 = vmatpush.msra.mxu0 0.0
    %760 = vmatpush.msra.mxu0 0.0
    %761 = vmatpush.msra.mxu0 0.0
    %762 = vmatpush.msra.mxu0 0.0
    %763 = vmatpush.msra.mxu0 0.0
    %764 = vmatpush.msra.mxu0 0.0
    %765 = vmatpush.msra.mxu0 0.0
    %766 = vmatpush.msra.mxu0 0.0
    %767 = vmatpush.msra.mxu0 0.0
    %768 = vmatpush.msra.mxu0 0.0
    %769 = vmatpush.msra.mxu0 %v749
    %770 = vmatpush.msra.mxu0 %v748
    %771 = vmatpush.msra.mxu0 %v747
    %772 = vmatpush.msra.mxu0 %v746
    %773 = vmatpush.msra.mxu0 %v745
    %774 = vmatmul.f32.gmra.mxu0 %v756
    %v775 = vpop.f32.mrf.mxu0
    %v776 = vadd.f32 %v752, %v775
    %777 = vdwg.mxu0
    %v778 = vxor.u32 %v776, 2147483648
    %v779 = vmul.f32 %v778, 1.442695
    %v780 = vpow.pop %v779
    %v781 = vadd.f32 %v780, 1.0
    %v782 = vrcp.pop %v781
    %v783 = vmul.f32 %v781, %v782
    %v784 = vsub.f32 1.0, %v783
    %v785 = vmul.f32 %v782, %v784
    %v786 = vadd.f32 %v782, %v785
    %vm787 = vweird.f32 %v781
    %vm788 = vweird.f32 %v782
    %vm789 = vmor %vm787, %vm788
    %v790 = vsel %vm789, %v782, %v786
    %v791 = vand.u32 2147483647, %v781
    %vm792 = vcmp.eq.f32.partialorder %v791, 8.507059e+37
    %v793 = vand.u32 %v781, 2147483648
    %v794 = vor.u32 1.1754944e-38, %v793
    %v795 = vsel %vm792, %v794, %v790
    %v796 = vmul.f32 1.0, %v795
    %798 = vrot.lane.b32.xlu0 %v776, 32
    %v799 = vpop.permute.xlu0 %798
    %v801 = vmul.f32 %v796, %v799
    %803 = vrot.lane.b32.xlu0 %v801, 64
    %v804 = vpop.permute.xlu0 %803
    %v806 = vadd.f32 %v776, %v804
    %v807 = vtanh.pop %v806
    %v808 = vsub.f32 1.0, %v796
    %810 = vrot.lane.b32.xlu0 %v807, 96
    %v811 = vpop.permute.xlu0 %810
    %v813 = vmul.f32 %v808, %v811
    %v814 = vmul.f32 %v796, %v226
    %v815 = vadd.f32 %v813, %v814
    %v816 = vmul.f32 %v216, %v815
    %v817 = vmul.f32 %v223, %v226
    %v818 = vadd.f32 %v816, %v817
    %820 = vrot.lane.b32.xlu0 %v818, 104
    %v821 = vpop.permute.xlu0 %820
    %v823 = vsel %vm743, %v730, %v821
    %v824 = vld [vmem:[%s11] sm:$0xff]
    %v825 = vld [vmem:[%s11 + $0x8] sm:$0xff]
    %v826 = vld [vmem:[%s11 + $0x10] sm:$0xff]
    %v827 = vld [vmem:[%s11 + $0x18] sm:$0xff]
    %v828 = vld [vmem:[%s11 + $0x20] sm:$0xff]
    %v829 = vld [vmem:[#allocation10] sm:$0x1]
    %v831 = vperm.slane %v829, 0
    %v834 = vsel %vm754, %v823, 0
    %836 = vmatpush.msra.mxu0 0.0
    %837 = vmatpush.msra.mxu0 0.0
    %838 = vmatpush.msra.mxu0 0.0
    %839 = vmatpush.msra.mxu0 0.0
    %840 = vmatpush.msra.mxu0 0.0
    %841 = vmatpush.msra.mxu0 0.0
    %842 = vmatpush.msra.mxu0 0.0
    %843 = vmatpush.msra.mxu0 0.0
    %844 = vmatpush.msra.mxu0 0.0
    %845 = vmatpush.msra.mxu0 0.0
    %846 = vmatpush.msra.mxu0 0.0
    %847 = vmatpush.msra.mxu0 %v828
    %848 = vmatpush.msra.mxu0 %v827
    %849 = vmatpush.msra.mxu0 %v826
    %850 = vmatpush.msra.mxu0 %v825
    %851 = vmatpush.msra.mxu0 %v824
    %852 = vmatmul.f32.gmra.mxu0 %v834
    %v853 = vpop.f32.mrf.mxu0
    %v854 = vadd.f32 %v831, %v853
    %855 = vdwg.mxu0
    %v856 = vadd.f32 %v854, %v139
    %858 = vrot.lane.b32.xlu0 %v856, 112
    %v859 = vpop.permute.xlu0 %858
    %v861 = vmax.f32 %v856, %v859
    %v862 = vld [vmem:[%s13] sm:$0xff]
    %v863 = vld [vmem:[%s13 + $0x8] sm:$0xff]
    %v864 = vld [vmem:[#allocation11] sm:$0x1]
    %v866 = vperm.slane %v864, 0
    %vm868 = vcmask 130048
    %v870 = vsel %vm868, %v861, 0
    %872 = vmatpush.msra.mxu0 0.0
    %873 = vmatpush.msra.mxu0 0.0
    %874 = vmatpush.msra.mxu0 0.0
    %875 = vmatpush.msra.mxu0 0.0
    %876 = vmatpush.msra.mxu0 0.0
    %877 = vmatpush.msra.mxu0 0.0
    %878 = vmatpush.msra.mxu0 0.0
    %879 = vmatpush.msra.mxu0 0.0
    %880 = vmatpush.msra.mxu0 0.0
    %881 = vmatpush.msra.mxu0 0.0
    %882 = vmatpush.msra.mxu0 0.0
    %883 = vmatpush.msra.mxu0 0.0
    %884 = vmatpush.msra.mxu0 0.0
    %885 = vmatpush.msra.mxu0 0.0
    %886 = vmatpush.msra.mxu0 %v863
    %887 = vmatpush.msra.mxu0 %v862
    %888 = vmatmul.f32.gmra.mxu0 %v870
    %v889 = vpop.f32.mrf.mxu0
    %v890 = vadd.f32 %v866, %v889
    %891 = vdwg.mxu0
    %vm892 = vcmask 58368
    %893 = vst.msk [vmem:[#allocation13] sm:$0x3] %vm892, %v890
    %vm894 = vcmask 320576
    %895 = vst.msk [vmem:[#allocation13] sm:$0x3] %vm894, %v821
    %v898 = vrot.slane %v738, 6
    %vm899 = vcmask 1041408
    %v900 = vsel %vm899, %v737, %v898
    %901 = vrot.lane.b32.xlu0 %v900, 40
    %v902 = vpop.permute.xlu0 %901
    %v903 = vrot.slane %v902, 6
    %v904 = vsel %vm754, %v903, %v902
    %vm906 = vcmask 1041728
    %vm907 = vcmask 1043458
    %vm908 = vmor %vm907, %vm906
    %vm909 = vcmask 324612
    %vm910 = vmor %vm909, %vm908
    %911 = vst.msk [vmem:[#allocation13] sm:$0x3f] %vm910, %v904
    // Predicated region
    $region86: #{tpu_custom_call.1} parent=1 // pred_check
      _
    $region87: #{tpu_custom_call.1} parent=1 // pred_check_branch
      %913 = sbr.rel (0) target = $region89
    $region88: #{tpu_custom_call.1} parent=1 // pred_region
      %915 = vsyncadd [#allocation4], 0
      %s917 = sshll.u32 [#allocation13], 4
      %s918 = int_to_ptr.vmem [resolvable:$true] %s917
      %s919 = sshll.u32 %s15, 4
      %s920 = int_to_ptr.hbm [resolvable:$true] %s919
      %922 = dma.vmem_to_hbm [thread:$0]  %s918, 96, %s920, [#allocation4]
    $region89: #{tpu_custom_call.1} parent=1 // pred_fallthru
      _
    // Predicated region
    $region90: #{tpu_custom_call.1} parent=1 // pred_check
      _
    $region91: #{tpu_custom_call.1} parent=1 // pred_check_branch
      %924 = sbr.rel (0) target = $region93
    $region92: #{tpu_custom_call.1} parent=1 // pred_region
      %926 = dma.done [#allocation4], 96
    $region93: #{tpu_custom_call.1} parent=1 // pred_fallthru
      _
    %927 = vsyncpa [#allocation3], 1
    %928 = vsyncpa [#allocation6], 1
    %929 = vsyncpa [#allocation9], 1
    %930 = vsyncpa [#allocation12], 1
    %931 = vsyncpa [#allocation4], 1

</llo_original>
